<compile_context>
chip_gen: v7x
topology: tpu7x:2x2x1
jax: 0.10.0
libtpu: 0.0.40
codegen_flags: <defaults>
</compile_context>

<pallas_src>
import functools

import jax
import jax.numpy as jnp
from jax import lax
from jax.experimental import pallas as pl
from jax.experimental.pallas import tpu as pltpu

LANE = 128   # lane-padded feature width (covers F=8, PSEUDO=10, C=4)
TM = 128     # A_hat rows per grid step (streamed fallback path)

_BF16 = jnp.bfloat16
_F32 = jnp.float32


# --------------------------- hardware helpers --------------------------------

_VMEM_CAP = None


def _vmem_capacity_bytes():
    """Physical VMEM capacity (fallback: 64 MiB, the smallest / v7x size)."""
    global _VMEM_CAP
    if _VMEM_CAP is None:
        try:
            _VMEM_CAP = int(pltpu.get_tpu_info().vmem_capacity_bytes)
        except Exception:
            _VMEM_CAP = 64 << 20
    return _VMEM_CAP


def _clamp_vmem_limit(need_bytes):
    """Scoped VMEM limit: at least 32 MiB, never above physical - 2 MiB."""
    cap = _vmem_capacity_bytes()
    return int(min(max(need_bytes, 32 << 20), cap - (2 << 20)))


def _fused_working_set_bytes(np_):
    a_bytes = np_ * np_ * 2                  # resident A_hat (bf16, single copy)
    slabs = 12 * np_ * LANE * 4              # x/py/f/out buffers + f32 temps
    weights = 8 * LANE * LANE * 4
    return a_bytes + slabs + weights + (4 << 20)


def _fused_fits(np_):
    return _fused_working_set_bytes(np_) <= int(0.75 * _vmem_capacity_bytes())


def _pad2(a, rows, cols, dtype):
    out = jnp.zeros((rows, cols), dtype)
    return out.at[: a.shape[0], : a.shape[1]].set(a.astype(dtype))


# ----------------------- fused single-call kernel -----------------------------

def _fused_gcn_kernel(x_ref, py_ref, a_hbm, wl_ref, bl_ref, w1_ref, b1_ref,
                      w2_ref, b2_ref, w3_ref, b3_ref,
                      f_ref, out_ref, a_vmem, dma_sem):
    """Whole GCN forward with A_hat VMEM-resident (read from HBM exactly once)."""
    # Kick off the single HBM->VMEM copy of A_hat; overlap with feature GEMMs.
    a_copy = pltpu.make_async_copy(a_hbm, a_vmem, dma_sem)
    a_copy.start()

    # H = x + linear1(pseudo_y) ;  HW1 = H @ W1   (bf16 operands, f32 acc)
    y = jnp.dot(py_ref[...].astype(_BF16), wl_ref[...],
                preferred_element_type=_F32) + bl_ref[...]
    h = x_ref[...] + y
    hw1 = jnp.dot(h.astype(_BF16), w1_ref[...],
                  preferred_element_type=_F32).astype(_BF16)

    a_copy.wait()
    a = a_vmem[...]

    # conv1: H2 = relu(A @ HW1 + b1)
    pre1 = jnp.dot(a, hw1, preferred_element_type=_F32) + b1_ref[...]
    h2 = jnp.maximum(pre1, 0.0)
    # TODO(synk): F.dropout(p=0.5) is identity here (eval-mode semantics);
    # training-mode dropout would need pltpu.prng_random_bits masking.
    hw2 = jnp.dot(h2.astype(_BF16), w2_ref[...],
                  preferred_element_type=_F32).astype(_BF16)

    # conv2: f = A @ HW2 + b2 (returned pre-activation)
    pre2 = jnp.dot(a, hw2, preferred_element_type=_F32) + b2_ref[...]
    f_ref[...] = pre2
    h3 = jnp.maximum(pre2, 0.0)
    hw3 = jnp.dot(h3.astype(_BF16), w3_ref[...],
                  preferred_element_type=_F32).astype(_BF16)

    # conv3: out = A @ HW3 + b3
    out_ref[...] = jnp.dot(a, hw3, preferred_element_type=_F32) + b3_ref[...]


def _forward_fused(x_p, py_p, a_p, pp, Np):
    def full(shape):
        return pl.BlockSpec(shape, lambda i: (0, 0))

    cp = pltpu.CompilerParams(
        dimension_semantics=("arbitrary",),
        vmem_limit_bytes=_clamp_vmem_limit(_fused_working_set_bytes(Np)),
    )
    f_pad, out_pad = pl.pallas_call(
        _fused_gcn_kernel,
        out_shape=(jax.ShapeDtypeStruct((Np, LANE), _F32),
                   jax.ShapeDtypeStruct((Np, LANE), _F32)),
        grid=(1,),
        in_specs=[full((Np, LANE)), full((Np, LANE)),
                  pl.BlockSpec(memory_space=pl.ANY),
                  full((LANE, LANE)), full((1, LANE)),
                  full((LANE, LANE)), full((1, LANE)),
                  full((LANE, LANE)), full((1, LANE)),
                  full((LANE, LANE)), full((1, LANE))],
        out_specs=(full((Np, LANE)), full((Np, LANE))),
        scratch_shapes=[pltpu.VMEM((Np, Np), _BF16),
                        pltpu.SemaphoreType.DMA(())],
        compiler_params=cp,
    )(x_p, py_p, a_p,
      pp["wl"], pp["bl"], pp["w1"], pp["b1"],
      pp["w2"], pp["b2"], pp["w3"], pp["b3"])
    return f_pad, out_pad


# ---------------------- streamed fallback kernels ------------------------------

def _feat_kernel(x_ref, py_ref, wl_ref, bl_ref, w1_ref, hw_ref):
    """Per row tile: H = x + pseudo_y @ Wl + bl ; HW1 = H @ W1 (bf16 out)."""
    y = jnp.dot(py_ref[...].astype(_BF16), wl_ref[...],
                preferred_element_type=_F32) + bl_ref[...]
    h = x_ref[...] + y
    hw_ref[...] = jnp.dot(h.astype(_BF16), w1_ref[...],
                          preferred_element_type=_F32).astype(hw_ref.dtype)


def _conv_hidden_kernel(a_ref, hw_ref, b_ref, wn_ref, hwn_ref):
    """conv1: pre = A_tile @ HW + b ; HW_next = relu(pre) @ W_next."""
    pre = jnp.dot(a_ref[...], hw_ref[...],
                  preferred_element_type=_F32) + b_ref[...]
    h = jnp.maximum(pre, 0.0)
    hwn_ref[...] = jnp.dot(h.astype(_BF16), wn_ref[...],
                           preferred_element_type=_F32).astype(hwn_ref.dtype)


def _conv_mid_kernel(a_ref, hw_ref, b_ref, wn_ref, pre_ref, hwn_ref):
    """conv2: f = A_tile @ HW + b (returned) ; HW_next = relu(f) @ W_next."""
    pre = jnp.dot(a_ref[...], hw_ref[...],
                  preferred_element_type=_F32) + b_ref[...]
    pre_ref[...] = pre
    h = jnp.maximum(pre, 0.0)
    hwn_ref[...] = jnp.dot(h.astype(_BF16), wn_ref[...],
                           preferred_element_type=_F32).astype(hwn_ref.dtype)


def _conv_last_kernel(a_ref, hw_ref, b_ref, out_ref):
    """conv3: out = A_tile @ HW + b."""
    out_ref[...] = jnp.dot(a_ref[...], hw_ref[...],
                           preferred_element_type=_F32) + b_ref[...]


def _streamed_cparams(np_, tm):
    a_buf = 2 * tm * np_ * 2            # double-buffered A row strip (bf16)
    hw_buf = 2 * np_ * LANE * 2         # double-buffered resident HW slab (bf16)
    io_buf = 2 * 4 * tm * LANE * 4      # double-buffered row-tile inputs/outputs
    w_buf = 8 * LANE * LANE * 4
    need = a_buf + hw_buf + io_buf + w_buf + (4 << 20)
    return pltpu.CompilerParams(
        dimension_semantics=("parallel",),
        vmem_limit_bytes=_clamp_vmem_limit(need),
    )


def _forward_streamed(x_p, py_p, a_p, pp, Np):
    grid = (Np // TM,)
    cp = _streamed_cparams(Np, TM)

    def row():
        return pl.BlockSpec((TM, LANE), lambda i: (i, 0))

    a_spec = pl.BlockSpec((TM, Np), lambda i: (i, 0))
    # Resident operands (constant block index -> fetched once, stays in VMEM).
    # TODO(synk): single-buffer via pipeline_mode=pl.Buffered(1) and add a K
    # grid axis so the VMEM footprint stops scaling with Np (v7x 64 MiB).
    hw_spec = pl.BlockSpec((Np, LANE), lambda i: (0, 0))
    b_spec = pl.BlockSpec((1, LANE), lambda i: (0, 0))
    w_spec = pl.BlockSpec((LANE, LANE), lambda i: (0, 0))

    hw1 = pl.pallas_call(
        _feat_kernel,
        out_shape=jax.ShapeDtypeStruct((Np, LANE), _BF16),
        grid=grid,
        in_specs=[row(), row(), w_spec, b_spec, w_spec],
        out_specs=row(),
        compiler_params=cp,
    )(x_p, py_p, pp["wl"], pp["bl"], pp["w1"])

    hw2 = pl.pallas_call(
        _conv_hidden_kernel,
        out_shape=jax.ShapeDtypeStruct((Np, LANE), _BF16),
        grid=grid,
        in_specs=[a_spec, hw_spec, b_spec, w_spec],
        out_specs=row(),
        compiler_params=cp,
    )(a_p, hw1, pp["b1"], pp["w2"])

    f_pad, hw3 = pl.pallas_call(
        _conv_mid_kernel,
        out_shape=(jax.ShapeDtypeStruct((Np, LANE), _F32),
                   jax.ShapeDtypeStruct((Np, LANE), _BF16)),
        grid=grid,
        in_specs=[a_spec, hw_spec, b_spec, w_spec],
        out_specs=(row(), row()),
        compiler_params=cp,
    )(a_p, hw2, pp["b2"], pp["w3"])

    out_pad = pl.pallas_call(
        _conv_last_kernel,
        out_shape=jax.ShapeDtypeStruct((Np, LANE), _F32),
        grid=grid,
        in_specs=[a_spec, hw_spec, b_spec],
        out_specs=row(),
        compiler_params=cp,
    )(a_p, hw3, pp["b3"])

    return f_pad, out_pad


# ----------------------------- forward ----------------------------------------

@functools.partial(jax.jit, static_argnames=("force_streamed",))
def gcn_forward(x, pseudo_y, a_hat, params, force_streamed=False):
    N, F = x.shape
    C = params["w3"].shape[1]
    Np = max(TM, ((N + TM - 1) // TM) * TM)

    # Lane-dense, zero-padded operands. A_hat and weights are bf16.
    a_p = _pad2(a_hat, Np, Np, _BF16)
    x_p = _pad2(x, Np, LANE, _F32)
    py_p = _pad2(pseudo_y, Np, LANE, _F32)
    pp = {
        "wl": _pad2(params["wl"], LANE, LANE, _BF16),
        "bl": _pad2(params["bl"], 1, LANE, _F32),
        "w1": _pad2(params["w1"], LANE, LANE, _BF16),
        "b1": _pad2(params["b1"], 1, LANE, _F32),
        "w2": _pad2(params["w2"], LANE, LANE, _BF16),
        "b2": _pad2(params["b2"], 1, LANE, _F32),
        "w3": _pad2(params["w3"], LANE, LANE, _BF16),
        "b3": _pad2(params["b3"], 1, LANE, _F32),
    }

    if force_streamed or not _fused_fits(Np):
        f_pad, out_pad = _forward_streamed(x_p, py_p, a_p, pp, Np)
    else:
        f_pad, out_pad = _forward_fused(x_p, py_p, a_p, pp, Np)

    return f_pad[:N, :F], out_pad[:N, :C]


# --------------------------- graph / params glue --------------------------------

def build_normalized_adjacency(edge_index, edge_values, num_nodes):
    """Dense PyG gcn_norm: A_hat = D^-1/2 (A + self-loops) D^-1/2.

    Mirrors add_remaining_self_loops: every node ends up with exactly one
    self-loop; nodes that already had one keep its weight, others get 1.
    """
    src = edge_index[0]
    dst = edge_index[1]
    if edge_values is None:
        edge_values = jnp.ones(src.shape[0], dtype=_F32)
    a = jnp.zeros((num_nodes, num_nodes), _F32).at[dst, src].add(edge_values)
    diag = jnp.diagonal(a)
    new_diag = jnp.where(diag > 0, diag, 1.0)
    a = a - jnp.diag(diag) + jnp.diag(new_diag)
    deg = a.sum(axis=1)
    dinv = jnp.where(deg > 0, lax.rsqrt(deg), 0.0)
    return dinv[:, None] * a * dinv[None, :]


def init_params(key, num_features, num_classes, pseudo_dim=10):
    ks = jax.random.split(key, 8)

    def glorot(k, shape):
        fan_in, fan_out = shape
        lim = jnp.sqrt(6.0 / (fan_in + fan_out))
        return jax.random.uniform(k, shape, jnp.float32, -lim, lim)

    return {
        # nn.Linear(10, F): stored pre-transposed as [10, F]
        "wl": glorot(ks[0], (pseudo_dim, num_features)),
        "bl": jax.random.uniform(ks[1], (1, num_features), jnp.float32,
                                 -0.1, 0.1),
        # GCNConv weights [in, out], zero bias (PyG default)
        "w1": glorot(ks[2], (num_features, num_features)),
        "b1": jnp.zeros((1, num_features), jnp.float32),
        "w2": glorot(ks[3], (num_features, num_features)),
        "b2": jnp.zeros((1, num_features), jnp.float32),
        "w3": glorot(ks[4], (num_features, num_classes)),
        "b3": jnp.zeros((1, num_classes), jnp.float32),
    }


def gcn_reference(x, pseudo_y, a_hat, params):
    """Pure-JAX f32 reference for validation."""
    h = x + pseudo_y @ params["wl"] + params["bl"]
    h1 = jnp.maximum(a_hat @ (h @ params["w1"]) + params["b1"], 0.0)
    f = a_hat @ (h1 @ params["w2"]) + params["b2"]
    h2 = jnp.maximum(f, 0.0)
    out = a_hat @ (h2 @ params["w3"]) + params["b3"]
    return f, out


if __name__ == "__main__":
    import numpy as np

    N, FEAT, CLASSES, PSEUDO = 16, 8, 4, 10

    key = jax.random.PRNGKey(0)
    kx, kp, ke, kparam = jax.random.split(key, 4)

    x = jax.random.normal(kx, (N, FEAT), jnp.float32)
    pseudo_y = jax.random.normal(kp, (N, PSEUDO), jnp.float32)

    # small synthetic graph: a ring plus a few random chords (undirected)
    ring_src = jnp.arange(N, dtype=jnp.int32)
    ring_dst = (ring_src + 1) % N
    extra_src = jax.random.randint(ke, (8,), 0, N, jnp.int32)
    extra_dst = (extra_src + 5) % N
    src = jnp.concatenate([ring_src, ring_dst, extra_src, extra_dst])
    dst = jnp.concatenate([ring_dst, ring_src, extra_dst, extra_src])
    edge_index = jnp.stack([src, dst])          # [2, E]

    a_hat = build_normalized_adjacency(edge_index, None, N)
    params = init_params(kparam, FEAT, CLASSES, PSEUDO)

    f_expected, out_expected = gcn_reference(x, pseudo_y, a_hat, params)

    # Primary fused path: A_hat read from HBM exactly once, single pallas_call.
    f, out = gcn_forward(x, pseudo_y, a_hat, params, force_streamed=False)
    jax.block_until_ready((f, out))
    assert f.shape == (N, FEAT) and out.shape == (N, CLASSES)
    np.testing.assert_allclose(np.asarray(f), np.asarray(f_expected),
                               rtol=6e-2, atol=6e-2)
    np.testing.assert_allclose(np.asarray(out), np.asarray(out_expected),
                               rtol=6e-2, atol=6e-2)

    # Streamed multi-call fallback (large-graph path), exercised for coverage.
    f2, out2 = gcn_forward(x, pseudo_y, a_hat, params, force_streamed=True)
    jax.block_until_ready((f2, out2))
    np.testing.assert_allclose(np.asarray(f2), np.asarray(f_expected),
                               rtol=6e-2, atol=6e-2)
    np.testing.assert_allclose(np.asarray(out2), np.asarray(out_expected),
                               rtol=6e-2, atol=6e-2)

    print("KERNEL_OK")
</pallas_src>

<mosaic_0001>
module attributes {stable_mosaic.version = 11 : i64} {
  func.func @_fused_gcn_kernel(%arg0: i32, %arg1: memref<128x128xf32, #tpu.memory_space<vmem>>, %arg2: memref<128x128xf32, #tpu.memory_space<vmem>>, %arg3: memref<128x128xbf16, #tpu.memory_space<any>>, %arg4: memref<128x128xbf16, #tpu.memory_space<vmem>>, %arg5: memref<1x128xf32, #tpu.memory_space<vmem>>, %arg6: memref<128x128xbf16, #tpu.memory_space<vmem>>, %arg7: memref<1x128xf32, #tpu.memory_space<vmem>>, %arg8: memref<128x128xbf16, #tpu.memory_space<vmem>>, %arg9: memref<1x128xf32, #tpu.memory_space<vmem>>, %arg10: memref<128x128xbf16, #tpu.memory_space<vmem>>, %arg11: memref<1x128xf32, #tpu.memory_space<vmem>>, %arg12: memref<128x128xf32, #tpu.memory_space<vmem>>, %arg13: memref<128x128xf32, #tpu.memory_space<vmem>>, %arg14: memref<128x128xbf16, #tpu.memory_space<vmem>>, %arg15: memref<!tpu.dma_semaphore, #tpu.memory_space<semaphore_mem>>) attributes {dimension_semantics = [#tpu.dimension_semantics<arbitrary>], iteration_bounds = array<i64: 1>, scalar_prefetch = 0 : i64, scratch_operands = 2 : i64, tpu.core_type = #tpu.core_type<tc>, window_params = [{pipeline_mode = #tpu.pipeline_mode<synchronous>, transform_indices = @transform_0, window_bounds = array<i64: 128, 128>}, {pipeline_mode = #tpu.pipeline_mode<synchronous>, transform_indices = @transform_1, window_bounds = array<i64: 128, 128>}, {}, {pipeline_mode = #tpu.pipeline_mode<synchronous>, transform_indices = @transform_3, window_bounds = array<i64: 128, 128>}, {pipeline_mode = #tpu.pipeline_mode<synchronous>, transform_indices = @transform_4, window_bounds = array<i64: 1, 128>}, {pipeline_mode = #tpu.pipeline_mode<synchronous>, transform_indices = @transform_5, window_bounds = array<i64: 128, 128>}, {pipeline_mode = #tpu.pipeline_mode<synchronous>, transform_indices = @transform_6, window_bounds = array<i64: 1, 128>}, {pipeline_mode = #tpu.pipeline_mode<synchronous>, transform_indices = @transform_7, window_bounds = array<i64: 128, 128>}, {pipeline_mode = #tpu.pipeline_mode<synchronous>, transform_indices = @transform_8, window_bounds = array<i64: 1, 128>}, {pipeline_mode = #tpu.pipeline_mode<synchronous>, transform_indices = @transform_9, window_bounds = array<i64: 128, 128>}, {pipeline_mode = #tpu.pipeline_mode<synchronous>, transform_indices = @transform_10, window_bounds = array<i64: 1, 128>}, {pipeline_mode = #tpu.pipeline_mode<synchronous>, transform_indices = @transform_11, window_bounds = array<i64: 128, 128>}, {pipeline_mode = #tpu.pipeline_mode<synchronous>, transform_indices = @transform_12, window_bounds = array<i64: 128, 128>}]} {
    tpu.enqueue_dma source(%arg3 : memref<128x128xbf16, #tpu.memory_space<any>>) target(%arg14 : memref<128x128xbf16, #tpu.memory_space<vmem>>) target_semaphore(%arg15 : memref<!tpu.dma_semaphore, #tpu.memory_space<semaphore_mem>>)
    %c0 = arith.constant 0 : index
    %c0_0 = arith.constant 0 : index
    %0 = vector.load %arg2[%c0, %c0_0] : memref<128x128xf32, #tpu.memory_space<vmem>>, vector<128x128xf32>
    %1 = arith.truncf %0 : vector<128x128xf32> to vector<128x128xbf16>
    %c0_1 = arith.constant 0 : index
    %c0_2 = arith.constant 0 : index
    %2 = vector.load %arg4[%c0_1, %c0_2] : memref<128x128xbf16, #tpu.memory_space<vmem>>, vector<128x128xbf16>
    %cst = arith.constant dense<0.000000e+00> : vector<128x128xf32>
    %3 = tpu.matmul %1, %2, %cst {dimension_numbers = #tpu.dot_dimension_numbers<[1], [0], [0], [1], [0, 0, 1, 1], [], []>} : vector<128x128xbf16>, vector<128x128xbf16>, vector<128x128xf32> -> vector<128x128xf32>
    %c0_3 = arith.constant 0 : index
    %c0_4 = arith.constant 0 : index
    %4 = vector.load %arg5[%c0_3, %c0_4] : memref<1x128xf32, #tpu.memory_space<vmem>>, vector<1x128xf32>
    %5 = vector.broadcast %4 : vector<1x128xf32> to vector<128x128xf32>
    %6 = arith.addf %3, %5 : vector<128x128xf32>
    %c0_5 = arith.constant 0 : index
    %c0_6 = arith.constant 0 : index
    %7 = vector.load %arg1[%c0_5, %c0_6] : memref<128x128xf32, #tpu.memory_space<vmem>>, vector<128x128xf32>
    %8 = arith.addf %7, %6 : vector<128x128xf32>
    %9 = arith.truncf %8 : vector<128x128xf32> to vector<128x128xbf16>
    %c0_7 = arith.constant 0 : index
    %c0_8 = arith.constant 0 : index
    %10 = vector.load %arg6[%c0_7, %c0_8] : memref<128x128xbf16, #tpu.memory_space<vmem>>, vector<128x128xbf16>
    %cst_9 = arith.constant dense<0.000000e+00> : vector<128x128xf32>
    %11 = tpu.matmul %9, %10, %cst_9 {dimension_numbers = #tpu.dot_dimension_numbers<[1], [0], [0], [1], [0, 0, 1, 1], [], []>} : vector<128x128xbf16>, vector<128x128xbf16>, vector<128x128xf32> -> vector<128x128xf32>
    %12 = arith.truncf %11 : vector<128x128xf32> to vector<128x128xbf16>
    tpu.wait_dma2 semaphore(%arg15 : memref<!tpu.dma_semaphore, #tpu.memory_space<semaphore_mem>>) src(%arg3 : memref<128x128xbf16, #tpu.memory_space<any>>) dst(%arg14 : memref<128x128xbf16, #tpu.memory_space<vmem>>)
    %c0_10 = arith.constant 0 : index
    %c0_11 = arith.constant 0 : index
    %13 = vector.load %arg14[%c0_10, %c0_11] : memref<128x128xbf16, #tpu.memory_space<vmem>>, vector<128x128xbf16>
    %cst_12 = arith.constant dense<0.000000e+00> : vector<128x128xf32>
    %14 = tpu.matmul %13, %12, %cst_12 {dimension_numbers = #tpu.dot_dimension_numbers<[1], [0], [0], [1], [0, 0, 1, 1], [], []>} : vector<128x128xbf16>, vector<128x128xbf16>, vector<128x128xf32> -> vector<128x128xf32>
    %c0_13 = arith.constant 0 : index
    %c0_14 = arith.constant 0 : index
    %15 = vector.load %arg7[%c0_13, %c0_14] : memref<1x128xf32, #tpu.memory_space<vmem>>, vector<1x128xf32>
    %16 = vector.broadcast %15 : vector<1x128xf32> to vector<128x128xf32>
    %17 = arith.addf %14, %16 : vector<128x128xf32>
    %cst_15 = arith.constant 0.000000e+00 : f32
    %18 = vector.broadcast %cst_15 : f32 to vector<128x128xf32>
    %19 = arith.maximumf %17, %18 : vector<128x128xf32>
    %20 = arith.truncf %19 : vector<128x128xf32> to vector<128x128xbf16>
    %c0_16 = arith.constant 0 : index
    %c0_17 = arith.constant 0 : index
    %21 = vector.load %arg8[%c0_16, %c0_17] : memref<128x128xbf16, #tpu.memory_space<vmem>>, vector<128x128xbf16>
    %cst_18 = arith.constant dense<0.000000e+00> : vector<128x128xf32>
    %22 = tpu.matmul %20, %21, %cst_18 {dimension_numbers = #tpu.dot_dimension_numbers<[1], [0], [0], [1], [0, 0, 1, 1], [], []>} : vector<128x128xbf16>, vector<128x128xbf16>, vector<128x128xf32> -> vector<128x128xf32>
    %23 = arith.truncf %22 : vector<128x128xf32> to vector<128x128xbf16>
    %cst_19 = arith.constant dense<0.000000e+00> : vector<128x128xf32>
    %24 = tpu.matmul %13, %23, %cst_19 {dimension_numbers = #tpu.dot_dimension_numbers<[1], [0], [0], [1], [0, 0, 1, 1], [], []>} : vector<128x128xbf16>, vector<128x128xbf16>, vector<128x128xf32> -> vector<128x128xf32>
    %c0_20 = arith.constant 0 : index
    %c0_21 = arith.constant 0 : index
    %25 = vector.load %arg9[%c0_20, %c0_21] : memref<1x128xf32, #tpu.memory_space<vmem>>, vector<1x128xf32>
    %26 = vector.broadcast %25 : vector<1x128xf32> to vector<128x128xf32>
    %27 = arith.addf %24, %26 : vector<128x128xf32>
    %c0_22 = arith.constant 0 : index
    %c0_23 = arith.constant 0 : index
    %28 = vector.load %arg12[%c0_22, %c0_23] : memref<128x128xf32, #tpu.memory_space<vmem>>, vector<128x128xf32>
    tpu.vector_store %arg12[%c0_22, %c0_23], %27 {strides = array<i32>} : memref<128x128xf32, #tpu.memory_space<vmem>>, vector<128x128xf32>,
    %cst_24 = arith.constant 0.000000e+00 : f32
    %29 = vector.broadcast %cst_24 : f32 to vector<128x128xf32>
    %30 = arith.maximumf %27, %29 : vector<128x128xf32>
    %31 = arith.truncf %30 : vector<128x128xf32> to vector<128x128xbf16>
    %c0_25 = arith.constant 0 : index
    %c0_26 = arith.constant 0 : index
    %32 = vector.load %arg10[%c0_25, %c0_26] : memref<128x128xbf16, #tpu.memory_space<vmem>>, vector<128x128xbf16>
    %cst_27 = arith.constant dense<0.000000e+00> : vector<128x128xf32>
    %33 = tpu.matmul %31, %32, %cst_27 {dimension_numbers = #tpu.dot_dimension_numbers<[1], [0], [0], [1], [0, 0, 1, 1], [], []>} : vector<128x128xbf16>, vector<128x128xbf16>, vector<128x128xf32> -> vector<128x128xf32>
    %34 = arith.truncf %33 : vector<128x128xf32> to vector<128x128xbf16>
    %cst_28 = arith.constant dense<0.000000e+00> : vector<128x128xf32>
    %35 = tpu.matmul %13, %34, %cst_28 {dimension_numbers = #tpu.dot_dimension_numbers<[1], [0], [0], [1], [0, 0, 1, 1], [], []>} : vector<128x128xbf16>, vector<128x128xbf16>, vector<128x128xf32> -> vector<128x128xf32>
    %c0_29 = arith.constant 0 : index
    %c0_30 = arith.constant 0 : index
    %36 = vector.load %arg11[%c0_29, %c0_30] : memref<1x128xf32, #tpu.memory_space<vmem>>, vector<1x128xf32>
    %37 = vector.broadcast %36 : vector<1x128xf32> to vector<128x128xf32>
    %38 = arith.addf %35, %37 : vector<128x128xf32>
    %c0_31 = arith.constant 0 : index
    %c0_32 = arith.constant 0 : index
    %39 = vector.load %arg13[%c0_31, %c0_32] : memref<128x128xf32, #tpu.memory_space<vmem>>, vector<128x128xf32>
    tpu.vector_store %arg13[%c0_31, %c0_32], %38 {strides = array<i32>} : memref<128x128xf32, #tpu.memory_space<vmem>>, vector<128x128xf32>,
    return
  }
  func.func @transform_0(%arg0: i32) -> (i32, i32) {
    %c0_i32 = arith.constant 0 : i32
    %c0_i32_0 = arith.constant 0 : i32
    %c0_i32_1 = arith.constant 0 : i32
    return %c0_i32, %c0_i32_0 : i32, i32
  }
  func.func @transform_1(%arg0: i32) -> (i32, i32) {
    %c0_i32 = arith.constant 0 : i32
    %c0_i32_0 = arith.constant 0 : i32
    %c0_i32_1 = arith.constant 0 : i32
    return %c0_i32, %c0_i32_0 : i32, i32
  }
  func.func @transform_3(%arg0: i32) -> (i32, i32) {
    %c0_i32 = arith.constant 0 : i32
    %c0_i32_0 = arith.constant 0 : i32
    %c0_i32_1 = arith.constant 0 : i32
    return %c0_i32, %c0_i32_0 : i32, i32
  }
  func.func @transform_4(%arg0: i32) -> (i32, i32) {
    %c0_i32 = arith.constant 0 : i32
    %c0_i32_0 = arith.constant 0 : i32
    %c0_i32_1 = arith.constant 0 : i32
    return %c0_i32, %c0_i32_0 : i32, i32
  }
  func.func @transform_5(%arg0: i32) -> (i32, i32) {
    %c0_i32 = arith.constant 0 : i32
    %c0_i32_0 = arith.constant 0 : i32
    %c0_i32_1 = arith.constant 0 : i32
    return %c0_i32, %c0_i32_0 : i32, i32
  }
  func.func @transform_6(%arg0: i32) -> (i32, i32) {
    %c0_i32 = arith.constant 0 : i32
    %c0_i32_0 = arith.constant 0 : i32
    %c0_i32_1 = arith.constant 0 : i32
    return %c0_i32, %c0_i32_0 : i32, i32
  }
  func.func @transform_7(%arg0: i32) -> (i32, i32) {
    %c0_i32 = arith.constant 0 : i32
    %c0_i32_0 = arith.constant 0 : i32
    %c0_i32_1 = arith.constant 0 : i32
    return %c0_i32, %c0_i32_0 : i32, i32
  }
  func.func @transform_8(%arg0: i32) -> (i32, i32) {
    %c0_i32 = arith.constant 0 : i32
    %c0_i32_0 = arith.constant 0 : i32
    %c0_i32_1 = arith.constant 0 : i32
    return %c0_i32, %c0_i32_0 : i32, i32
  }
  func.func @transform_9(%arg0: i32) -> (i32, i32) {
    %c0_i32 = arith.constant 0 : i32
    %c0_i32_0 = arith.constant 0 : i32
    %c0_i32_1 = arith.constant 0 : i32
    return %c0_i32, %c0_i32_0 : i32, i32
  }
  func.func @transform_10(%arg0: i32) -> (i32, i32) {
    %c0_i32 = arith.constant 0 : i32
    %c0_i32_0 = arith.constant 0 : i32
    %c0_i32_1 = arith.constant 0 : i32
    return %c0_i32, %c0_i32_0 : i32, i32
  }
  func.func @transform_11(%arg0: i32) -> (i32, i32) {
    %c0_i32 = arith.constant 0 : i32
    %c0_i32_0 = arith.constant 0 : i32
    %c0_i32_1 = arith.constant 0 : i32
    return %c0_i32, %c0_i32_0 : i32, i32
  }
  func.func @transform_12(%arg0: i32) -> (i32, i32) {
    %c0_i32 = arith.constant 0 : i32
    %c0_i32_0 = arith.constant 0 : i32
    %c0_i32_1 = arith.constant 0 : i32
    return %c0_i32, %c0_i32_0 : i32, i32
  }
}

</mosaic_0001>

<llo_original>
// kernel: gcn_forward.1
$region0: #{gcn_forward.1}
  #allocation0 [shape = 'u32[]', space=smem, size = 0x4, offset = 0x4, fixed_abs, tag = 'smem constant byte address 0x4 - core index']
  #allocation1 [shape = 'u32[144,128]{1,0:T(1,128)}', space=vmem, size = 0x12000, scoped, tag = 'internal scratch']
  #allocation2 [shape = 'bf16[128,128]{1,0:T(16,128)(2,1)}', space=vmem, size = 0x8000, scoped, tag = 'scratch operand']
  #allocation3 [shape = 's32[1]{0}', space=sflag, size = 0x4, scoped, tag = 'scratch operand']
  #allocation4 [shape = 's32[]', space=sflag, size = 0x4, offset = 0, fixed_abs, tag = 'sflag constant byte address 0x0 - dummy sync flag']
  %s0 = inlined_call_operand.vmem [shape: f32[128,128], index: 0, kind: input, shape index: {}]
  %s1 = inlined_call_operand.vmem [shape: f32[128,128], index: 1, kind: input, shape index: {}]
  %s2 = inlined_call_operand.vmem [shape: bf16[128,128], index: 2, kind: input, shape index: {}]
  %s3 = inlined_call_operand.vmem [shape: bf16[128,128], index: 3, kind: input, shape index: {}]
  %s4 = inlined_call_operand.vmem [shape: f32[1,128], index: 4, kind: input, shape index: {}]
  %s5 = inlined_call_operand.vmem [shape: bf16[128,128], index: 5, kind: input, shape index: {}]
  %s6 = inlined_call_operand.vmem [shape: f32[1,128], index: 6, kind: input, shape index: {}]
  %s7 = inlined_call_operand.vmem [shape: bf16[128,128], index: 7, kind: input, shape index: {}]
  %s8 = inlined_call_operand.vmem [shape: f32[1,128], index: 8, kind: input, shape index: {}]
  %s9 = inlined_call_operand.vmem [shape: bf16[128,128], index: 9, kind: input, shape index: {}]
  %s10 = inlined_call_operand.vmem [shape: f32[1,128], index: 10, kind: input, shape index: {}]
  %s11 = inlined_call_operand.vmem [shape: f32[128,128], index: 11, kind: output, shape index: {0}]
  %s12 = inlined_call_operand.vmem [shape: f32[128,128], index: 12, kind: output, shape index: {1}]
  %13 = xla_tuple %s11, %s12
  %s14 = sld [smem:[#allocation0]]
  $region92: #{gcn_forward.1} parent=0
    _
  %s16 = ssub.s32 1, %s14
  %s17 = scalar_select 0, %s16, %s14
  // Predicated region
  $region2: #{gcn_forward.1} parent=0 // pred_check
    _
  $region3: #{gcn_forward.1} parent=0 // pred_check_branch
    %19 = sbr.rel (0) target = $region5
  $region4: #{gcn_forward.1} parent=0 // pred_region
    _
  $region5: #{gcn_forward.1} parent=0 // pred_fallthru
    _
  // Predicated region
  $region6: #{gcn_forward.1} parent=0 // pred_check
    _
  $region7: #{gcn_forward.1} parent=0 // pred_check_branch
    %21 = sbr.rel (0) target = $region9
  $region8: #{gcn_forward.1} parent=0 // pred_region
    _
  $region9: #{gcn_forward.1} parent=0 // pred_fallthru
    _
  // Predicated region
  $region10: #{gcn_forward.1} parent=0 // pred_check
    _
  $region11: #{gcn_forward.1} parent=0 // pred_check_branch
    %23 = sbr.rel (0) target = $region13
  $region12: #{gcn_forward.1} parent=0 // pred_region
    _
  $region13: #{gcn_forward.1} parent=0 // pred_fallthru
    _
  // Predicated region
  $region14: #{gcn_forward.1} parent=0 // pred_check
    _
  $region15: #{gcn_forward.1} parent=0 // pred_check_branch
    %25 = sbr.rel (0) target = $region17
  $region16: #{gcn_forward.1} parent=0 // pred_region
    _
  $region17: #{gcn_forward.1} parent=0 // pred_fallthru
    _
  // Predicated region
  $region18: #{gcn_forward.1} parent=0 // pred_check
    _
  $region19: #{gcn_forward.1} parent=0 // pred_check_branch
    %27 = sbr.rel (0) target = $region21
  $region20: #{gcn_forward.1} parent=0 // pred_region
    _
  $region21: #{gcn_forward.1} parent=0 // pred_fallthru
    _
  // Predicated region
  $region22: #{gcn_forward.1} parent=0 // pred_check
    _
  $region23: #{gcn_forward.1} parent=0 // pred_check_branch
    %29 = sbr.rel (0) target = $region25
  $region24: #{gcn_forward.1} parent=0 // pred_region
    _
  $region25: #{gcn_forward.1} parent=0 // pred_fallthru
    _
  // Predicated region
  $region26: #{gcn_forward.1} parent=0 // pred_check
    _
  $region27: #{gcn_forward.1} parent=0 // pred_check_branch
    %31 = sbr.rel (0) target = $region29
  $region28: #{gcn_forward.1} parent=0 // pred_region
    _
  $region29: #{gcn_forward.1} parent=0 // pred_fallthru
    _
  // Predicated region
  $region30: #{gcn_forward.1} parent=0 // pred_check
    _
  $region31: #{gcn_forward.1} parent=0 // pred_check_branch
    %33 = sbr.rel (0) target = $region33
  $region32: #{gcn_forward.1} parent=0 // pred_region
    _
  $region33: #{gcn_forward.1} parent=0 // pred_fallthru
    _
  // Predicated region
  $region34: #{gcn_forward.1} parent=0 // pred_check
    _
  $region35: #{gcn_forward.1} parent=0 // pred_check_branch
    %35 = sbr.rel (0) target = $region37
  $region36: #{gcn_forward.1} parent=0 // pred_region
    _
  $region37: #{gcn_forward.1} parent=0 // pred_fallthru
    _
  // Predicated region
  $region38: #{gcn_forward.1} parent=0 // pred_check
    _
  $region39: #{gcn_forward.1} parent=0 // pred_check_branch
    %37 = sbr.rel (0) target = $region41
  $region40: #{gcn_forward.1} parent=0 // pred_region
    _
  $region41: #{gcn_forward.1} parent=0 // pred_fallthru
    _
  %p40 = scmp.lt.u32.totalorder 64, 8
  %p41 = pneg %p40
  // Predicated region
  $region42: #{gcn_forward.1} parent=0 // pred_check
    _
  $region43: #{gcn_forward.1} parent=0 // pred_check_branch
    %43 = sbr.rel (%p40) target = $region45
  $region44: #{gcn_forward.1} parent=0 // pred_region
    %s58 = sand.u32 64, 7
    %p59 = scmp.eq.s32.totalorder %s58, 0
    // Predicated region
    $region57: #{gcn_forward.1} parent=44 // pred_check
      %p60 = pneg %p59
    $region58: #{gcn_forward.1} parent=44 // pred_check_branch
      %62 = sbr.rel (%p60) target = $region60
    $region59: #{gcn_forward.1} parent=44 // pred_region
      loop: start=0, step=1, limit=1
      $region61: #{gcn_forward.1} parent=59 // loop_pre_header
        _
      $region62: #{gcn_forward.1} parent=59 // loop_header
        %s64 = sphi 0, %s68
        %p65 = scmp.ge.s32.totalorder %s64, 1
        %s69 = sphi %s2, %s2
        %s70 = sphi [#allocation2], [#allocation2]
      $region63: #{gcn_forward.1} parent=59 // loop_header_branch
        %67 = sbr.rel (%p65) target = $region67
      $region64: #{gcn_forward.1} parent=59 // loop_body
        %v71 = vld [vmem:[%s69] sm:$0xff]
        %72 = vst [vmem:[%s70] sm:$0xff] %v71
        %v73 = vld [vmem:[%s69 + $0x8] sm:$0xff]
        %74 = vst [vmem:[%s70 + $0x8] sm:$0xff] %v73
        %v75 = vld [vmem:[%s69 + $0x10] sm:$0xff]
        %76 = vst [vmem:[%s70 + $0x10] sm:$0xff] %v75
        %v77 = vld [vmem:[%s69 + $0x18] sm:$0xff]
        %78 = vst [vmem:[%s70 + $0x18] sm:$0xff] %v77
        %v79 = vld [vmem:[%s69 + $0x20] sm:$0xff]
        %80 = vst [vmem:[%s70 + $0x20] sm:$0xff] %v79
        %v81 = vld [vmem:[%s69 + $0x28] sm:$0xff]
        %82 = vst [vmem:[%s70 + $0x28] sm:$0xff] %v81
        %v83 = vld [vmem:[%s69 + $0x30] sm:$0xff]
        %84 = vst [vmem:[%s70 + $0x30] sm:$0xff] %v83
        %v85 = vld [vmem:[%s69 + $0x38] sm:$0xff]
        %86 = vst [vmem:[%s70 + $0x38] sm:$0xff] %v85
      $region65: #{gcn_forward.1} parent=59 // loop_footer
        %s68 = sadd.s32 1, %s64
      $region66: #{gcn_forward.1} parent=59 // loop_footer_branch
        %63 = sbr.rel target = $region62
      $region67: #{gcn_forward.1} parent=59 // loop_exit
        _
    $region60: #{gcn_forward.1} parent=44 // pred_fallthru
      _
    %p87 = pneg %p59
    // Predicated region
    $region68: #{gcn_forward.1} parent=44 // pred_check
      _
    $region69: #{gcn_forward.1} parent=44 // pred_check_branch
      %89 = sbr.rel (%p59) target = $region71
    $region70: #{gcn_forward.1} parent=44 // pred_region
      %s90 = sand.u32 64, 7
    $region71: #{gcn_forward.1} parent=44 // pred_fallthru
      _
  $region45: #{gcn_forward.1} parent=0 // pred_fallthru
    _
  // Predicated region
  $region46: #{gcn_forward.1} parent=0 // pred_check
    %p44 = pneg %p40
  $region47: #{gcn_forward.1} parent=0 // pred_check_branch
    %46 = sbr.rel (%p44) target = $region49
  $region48: #{gcn_forward.1} parent=0 // pred_region
    %s47 = sshllo.u32 0, 64
    loop: start=0, step=1, limit=1
    $region50: #{gcn_forward.1} parent=48 // loop_pre_header
      _
    $region51: #{gcn_forward.1} parent=48 // loop_header
      %s49 = sphi 0, %s53
      %p50 = scmp.ge.s32.totalorder %s49, 1
      %s54 = sphi %s2, %s2
      %s55 = sphi [#allocation2], [#allocation2]
    $region52: #{gcn_forward.1} parent=48 // loop_header_branch
      %52 = sbr.rel (%p50) target = $region56
    $region53: #{gcn_forward.1} parent=48 // loop_body
      %v56 = vld [vmem:[%s54] sm:%s47]
      %57 = vst [vmem:[%s55] sm:%s47] %v56
    $region54: #{gcn_forward.1} parent=48 // loop_footer
      %s53 = sadd.s32 1, %s49
    $region55: #{gcn_forward.1} parent=48 // loop_footer_branch
      %48 = sbr.rel target = $region51
    $region56: #{gcn_forward.1} parent=48 // loop_exit
      _
  $region49: #{gcn_forward.1} parent=0 // pred_fallthru
    _
  // Predicated region
  $region72: #{gcn_forward.1} parent=0 // pred_check
    _
  $region73: #{gcn_forward.1} parent=0 // pred_check_branch
    %93 = sbr.rel (0) target = $region75
  $region74: #{gcn_forward.1} parent=0 // pred_region
    %94 = vsyncadd [#allocation3], 1024
  $region75: #{gcn_forward.1} parent=0 // pred_fallthru
    _
  %v95 = vld [vmem:[%s1] sm:$0xff]
  %v96 = vld [vmem:[%s1 + $0x8] sm:$0xff]
  %v97 = vld [vmem:[%s1 + $0x10] sm:$0xff]
  %v98 = vld [vmem:[%s1 + $0x18] sm:$0xff]
  %v99 = vld [vmem:[%s1 + $0x20] sm:$0xff]
  %v100 = vld [vmem:[%s1 + $0x28] sm:$0xff]
  %v101 = vld [vmem:[%s1 + $0x30] sm:$0xff]
  %v102 = vld [vmem:[%s1 + $0x38] sm:$0xff]
  %v103 = vld [vmem:[%s1 + $0x40] sm:$0xff]
  %v104 = vld [vmem:[%s1 + $0x48] sm:$0xff]
  %v105 = vld [vmem:[%s1 + $0x50] sm:$0xff]
  %v106 = vld [vmem:[%s1 + $0x58] sm:$0xff]
  %v107 = vld [vmem:[%s1 + $0x60] sm:$0xff]
  %v108 = vld [vmem:[%s1 + $0x68] sm:$0xff]
  %v109 = vld [vmem:[%s1 + $0x70] sm:$0xff]
  %v110 = vld [vmem:[%s1 + $0x78] sm:$0xff]
  %v111 = vpack.c.bf16 %v96, %v95
  %v112 = vpack.c.bf16 %v98, %v97
  %v113 = vpack.c.bf16 %v100, %v99
  %v114 = vpack.c.bf16 %v102, %v101
  %v115 = vpack.c.bf16 %v104, %v103
  %v116 = vpack.c.bf16 %v106, %v105
  %v117 = vpack.c.bf16 %v108, %v107
  %v118 = vpack.c.bf16 %v110, %v109
  %v119 = vld [vmem:[%s3] sm:$0xf]
  %v120 = vld [vmem:[%s3 + $0x4] sm:$0xf]
  %v121 = vld [vmem:[%s3 + $0x8] sm:$0xf]
  %v122 = vld [vmem:[%s3 + $0xc] sm:$0xf]
  %v123 = vld [vmem:[%s3 + $0x10] sm:$0xf]
  %v124 = vld [vmem:[%s3 + $0x14] sm:$0xf]
  %v125 = vld [vmem:[%s3 + $0x18] sm:$0xf]
  %v126 = vld [vmem:[%s3 + $0x1c] sm:$0xf]
  %v127 = vld [vmem:[%s3 + $0x20] sm:$0xf]
  %v128 = vld [vmem:[%s3 + $0x24] sm:$0xf]
  %v129 = vld [vmem:[%s3 + $0x28] sm:$0xf]
  %v130 = vld [vmem:[%s3 + $0x2c] sm:$0xf]
  %v131 = vld [vmem:[%s3 + $0x30] sm:$0xf]
  %v132 = vld [vmem:[%s3 + $0x34] sm:$0xf]
  %v133 = vld [vmem:[%s3 + $0x38] sm:$0xf]
  %v134 = vld [vmem:[%s3 + $0x3c] sm:$0xf]
  %v135 = vld [vmem:[%s4] sm:$0x1]
  %v137 = vlaneseq
  %v138 = vshrl.u32 %v137, 7
  %v139 = vsub.s32 0, %v138
  %v140 = vrot.slane %v135, %v139
  %v158 = vunpack.c.l.b16 %v119
  %v159 = vunpack.c.l.b16 %v120
  %v160 = vunpack.c.l.b16 %v121
  %v161 = vunpack.c.l.b16 %v122
  %v162 = vunpack.c.l.b16 %v123
  %v163 = vunpack.c.l.b16 %v124
  %v164 = vunpack.c.l.b16 %v125
  %v165 = vunpack.c.l.b16 %v126
  %v166 = vunpack.c.l.b16 %v127
  %v167 = vunpack.c.l.b16 %v128
  %v168 = vunpack.c.l.b16 %v129
  %v169 = vunpack.c.l.b16 %v130
  %v170 = vunpack.c.l.b16 %v131
  %v171 = vunpack.c.l.b16 %v132
  %v172 = vunpack.c.l.b16 %v133
  %v173 = vunpack.c.l.b16 %v134
  %v174 = vpack.c.b16 %v159, %v158
  %v175 = vpack.c.b16 %v161, %v160
  %v176 = vpack.c.b16 %v163, %v162
  %v177 = vpack.c.b16 %v165, %v164
  %v178 = vpack.c.b16 %v167, %v166
  %v179 = vpack.c.b16 %v169, %v168
  %v180 = vpack.c.b16 %v171, %v170
  %v181 = vpack.c.b16 %v173, %v172
  %190 = vmatprep.subr.bf16.mxu0 0
  %191 = vmatpush1.bf16.msra.mxu0 %v174
  %192 = vmatprep.subr.bf16.mxu0 0
  %193 = vmatpush1.bf16.msra.mxu0 %v175
  %194 = vmatprep.subr.bf16.mxu0 0
  %195 = vmatpush1.bf16.msra.mxu0 %v176
  %196 = vmatprep.subr.bf16.mxu0 0
  %197 = vmatpush1.bf16.msra.mxu0 %v177
  %198 = vmatprep.subr.bf16.mxu0 0
  %199 = vmatpush1.bf16.msra.mxu0 %v178
  %200 = vmatprep.subr.bf16.mxu0 0
  %201 = vmatpush1.bf16.msra.mxu0 %v179
  %202 = vmatprep.subr.bf16.mxu0 0
  %203 = vmatpush1.bf16.msra.mxu0 %v180
  %204 = vmatprep.subr.bf16.mxu0 0
  %205 = vmatpush1.bf16.msra.mxu0 %v181
  %206 = vmatprep.subr.bf16.mxu0 0
  %207 = vmatpush1.bf16.msra.mxu0 0
  %208 = vmatprep.subr.bf16.mxu0 0
  %209 = vmatpush1.bf16.msra.mxu0 0
  %210 = vmatprep.subr.bf16.mxu0 0
  %211 = vmatpush1.bf16.msra.mxu0 0
  %212 = vmatprep.subr.bf16.mxu0 0
  %213 = vmatpush1.bf16.msra.mxu0 0
  %214 = vmatprep.subr.bf16.mxu0 0
  %215 = vmatpush1.bf16.msra.mxu0 0
  %216 = vmatprep.subr.bf16.mxu0 0
  %217 = vmatpush1.bf16.msra.mxu0 0
  %218 = vmatprep.subr.bf16.mxu0 0
  %219 = vmatpush1.bf16.msra.mxu0 0
  %220 = vmatprep.subr.bf16.mxu0 0
  %221 = vmatpush1.bf16.msra.mxu0 0
  %222 = vmatprep.mubr.bf16.mxu0 0
  %223 = vmatmul.mubr.bf16.gmra.mrb[0].mxu0 %v111
  %v224 = vpop.f32.mrb[0].mxu0
  %v225 = vadd.f32 %v140, %v224
  %v226 = vpop.f32.mrb[0].mxu0
  %v227 = vpop.f32.mrb[0].mxu0
  %v228 = vadd.f32 %v140, %v227
  %v229 = vpop.f32.mrb[0].mxu0
  %230 = vmatprep.mubr.bf16.mxu0 0
  %231 = vmatmul.mubr.bf16.gmra.mrb[0].mxu0 %v112
  %v232 = vpop.f32.mrb[0].mxu0
  %v233 = vadd.f32 %v140, %v232
  %v234 = vpop.f32.mrb[0].mxu0
  %v235 = vpop.f32.mrb[0].mxu0
  %v236 = vadd.f32 %v140, %v235
  %v237 = vpop.f32.mrb[0].mxu0
  %238 = vmatprep.mubr.bf16.mxu0 0
  %239 = vmatmul.mubr.bf16.gmra.mrb[0].mxu0 %v113
  %v240 = vpop.f32.mrb[0].mxu0
  %v241 = vadd.f32 %v140, %v240
  %v242 = vpop.f32.mrb[0].mxu0
  %v243 = vpop.f32.mrb[0].mxu0
  %v244 = vadd.f32 %v140, %v243
  %v245 = vpop.f32.mrb[0].mxu0
  %246 = vmatprep.mubr.bf16.mxu0 0
  %247 = vmatmul.mubr.bf16.gmra.mrb[0].mxu0 %v114
  %v248 = vpop.f32.mrb[0].mxu0
  %v249 = vadd.f32 %v140, %v248
  %v250 = vpop.f32.mrb[0].mxu0
  %v251 = vpop.f32.mrb[0].mxu0
  %v252 = vadd.f32 %v140, %v251
  %v253 = vpop.f32.mrb[0].mxu0
  %254 = vmatprep.mubr.bf16.mxu0 0
  %255 = vmatmul.mubr.bf16.gmra.mrb[0].mxu0 %v115
  %v256 = vpop.f32.mrb[0].mxu0
  %v257 = vadd.f32 %v140, %v256
  %v258 = vpop.f32.mrb[0].mxu0
  %v259 = vpop.f32.mrb[0].mxu0
  %v260 = vadd.f32 %v140, %v259
  %v261 = vpop.f32.mrb[0].mxu0
  %262 = vmatprep.mubr.bf16.mxu0 0
  %263 = vmatmul.mubr.bf16.gmra.mrb[0].mxu0 %v116
  %v264 = vpop.f32.mrb[0].mxu0
  %v265 = vadd.f32 %v140, %v264
  %v266 = vpop.f32.mrb[0].mxu0
  %v267 = vpop.f32.mrb[0].mxu0
  %v268 = vadd.f32 %v140, %v267
  %v269 = vpop.f32.mrb[0].mxu0
  %270 = vmatprep.mubr.bf16.mxu0 0
  %271 = vmatmul.mubr.bf16.gmra.mrb[0].mxu0 %v117
  %v272 = vpop.f32.mrb[0].mxu0
  %v273 = vadd.f32 %v140, %v272
  %v274 = vpop.f32.mrb[0].mxu0
  %v275 = vpop.f32.mrb[0].mxu0
  %v276 = vadd.f32 %v140, %v275
  %v277 = vpop.f32.mrb[0].mxu0
  %278 = vmatprep.mubr.bf16.mxu0 0
  %279 = vmatmul.mubr.bf16.gmra.mrb[0].mxu0 %v118
  %v280 = vpop.f32.mrb[0].mxu0
  %v281 = vadd.f32 %v140, %v280
  %v282 = vpop.f32.mrb[0].mxu0
  %v283 = vpop.f32.mrb[0].mxu0
  %v284 = vadd.f32 %v140, %v283
  %v285 = vpop.f32.mrb[0].mxu0
  %286 = vdwg.mxu0
  %v287 = vld [vmem:[%s0] sm:$0xff]
  %v288 = vld [vmem:[%s0 + $0x8] sm:$0xff]
  %v289 = vld [vmem:[%s0 + $0x10] sm:$0xff]
  %v290 = vld [vmem:[%s0 + $0x18] sm:$0xff]
  %v291 = vld [vmem:[%s0 + $0x20] sm:$0xff]
  %v292 = vld [vmem:[%s0 + $0x28] sm:$0xff]
  %v293 = vld [vmem:[%s0 + $0x30] sm:$0xff]
  %v294 = vld [vmem:[%s0 + $0x38] sm:$0xff]
  %v295 = vld [vmem:[%s0 + $0x40] sm:$0xff]
  %v296 = vld [vmem:[%s0 + $0x48] sm:$0xff]
  %v297 = vld [vmem:[%s0 + $0x50] sm:$0xff]
  %v298 = vld [vmem:[%s0 + $0x58] sm:$0xff]
  %v299 = vld [vmem:[%s0 + $0x60] sm:$0xff]
  %v300 = vld [vmem:[%s0 + $0x68] sm:$0xff]
  %v301 = vld [vmem:[%s0 + $0x70] sm:$0xff]
  %v302 = vld [vmem:[%s0 + $0x78] sm:$0xff]
  %v303 = vadd.f32 %v287, %v225
  %v304 = vadd.f32 %v288, %v228
  %v305 = vadd.f32 %v289, %v233
  %v306 = vadd.f32 %v290, %v236
  %v307 = vadd.f32 %v291, %v241
  %v308 = vadd.f32 %v292, %v244
  %v309 = vadd.f32 %v293, %v249
  %v310 = vadd.f32 %v294, %v252
  %v311 = vadd.f32 %v295, %v257
  %v312 = vadd.f32 %v296, %v260
  %v313 = vadd.f32 %v297, %v265
  %v314 = vadd.f32 %v298, %v268
  %v315 = vadd.f32 %v299, %v273
  %v316 = vadd.f32 %v300, %v276
  %v317 = vadd.f32 %v301, %v281
  %v318 = vadd.f32 %v302, %v284
  %v319 = vpack.c.bf16 %v304, %v303
  %v320 = vpack.c.bf16 %v306, %v305
  %v321 = vpack.c.bf16 %v308, %v307
  %v322 = vpack.c.bf16 %v310, %v309
  %v323 = vpack.c.bf16 %v312, %v311
  %v324 = vpack.c.bf16 %v314, %v313
  %v325 = vpack.c.bf16 %v316, %v315
  %v326 = vpack.c.bf16 %v318, %v317
  %v327 = vld [vmem:[%s5] sm:$0xf]
  %v328 = vld [vmem:[%s5 + $0x4] sm:$0xf]
  %v329 = vld [vmem:[%s5 + $0x8] sm:$0xf]
  %v330 = vld [vmem:[%s5 + $0xc] sm:$0xf]
  %v331 = vld [vmem:[%s5 + $0x10] sm:$0xf]
  %v332 = vld [vmem:[%s5 + $0x14] sm:$0xf]
  %v333 = vld [vmem:[%s5 + $0x18] sm:$0xf]
  %v334 = vld [vmem:[%s5 + $0x1c] sm:$0xf]
  %v335 = vld [vmem:[%s5 + $0x20] sm:$0xf]
  %v336 = vld [vmem:[%s5 + $0x24] sm:$0xf]
  %v337 = vld [vmem:[%s5 + $0x28] sm:$0xf]
  %v338 = vld [vmem:[%s5 + $0x2c] sm:$0xf]
  %v339 = vld [vmem:[%s5 + $0x30] sm:$0xf]
  %v340 = vld [vmem:[%s5 + $0x34] sm:$0xf]
  %v341 = vld [vmem:[%s5 + $0x38] sm:$0xf]
  %v342 = vld [vmem:[%s5 + $0x3c] sm:$0xf]
  %v359 = vunpack.c.l.b16 %v327
  %v360 = vunpack.c.l.b16 %v328
  %v361 = vunpack.c.l.b16 %v329
  %v362 = vunpack.c.l.b16 %v330
  %v363 = vunpack.c.l.b16 %v331
  %v364 = vunpack.c.l.b16 %v332
  %v365 = vunpack.c.l.b16 %v333
  %v366 = vunpack.c.l.b16 %v334
  %v367 = vunpack.c.l.b16 %v335
  %v368 = vunpack.c.l.b16 %v336
  %v369 = vunpack.c.l.b16 %v337
  %v370 = vunpack.c.l.b16 %v338
  %v371 = vunpack.c.l.b16 %v339
  %v372 = vunpack.c.l.b16 %v340
  %v373 = vunpack.c.l.b16 %v341
  %v374 = vunpack.c.l.b16 %v342
  %v375 = vpack.c.b16 %v360, %v359
  %v376 = vpack.c.b16 %v362, %v361
  %v377 = vpack.c.b16 %v364, %v363
  %v378 = vpack.c.b16 %v366, %v365
  %v379 = vpack.c.b16 %v368, %v367
  %v380 = vpack.c.b16 %v370, %v369
  %v381 = vpack.c.b16 %v372, %v371
  %v382 = vpack.c.b16 %v374, %v373
  %391 = vmatprep.subr.bf16.mxu0 0
  %392 = vmatpush1.bf16.msra.mxu0 %v375
  %393 = vmatprep.subr.bf16.mxu0 0
  %394 = vmatpush1.bf16.msra.mxu0 %v376
  %395 = vmatprep.subr.bf16.mxu0 0
  %396 = vmatpush1.bf16.msra.mxu0 %v377
  %397 = vmatprep.subr.bf16.mxu0 0
  %398 = vmatpush1.bf16.msra.mxu0 %v378
  %399 = vmatprep.subr.bf16.mxu0 0
  %400 = vmatpush1.bf16.msra.mxu0 %v379
  %401 = vmatprep.subr.bf16.mxu0 0
  %402 = vmatpush1.bf16.msra.mxu0 %v380
  %403 = vmatprep.subr.bf16.mxu0 0
  %404 = vmatpush1.bf16.msra.mxu0 %v381
  %405 = vmatprep.subr.bf16.mxu0 0
  %406 = vmatpush1.bf16.msra.mxu0 %v382
  %407 = vmatprep.subr.bf16.mxu0 0
  %408 = vmatpush1.bf16.msra.mxu0 0
  %409 = vmatprep.subr.bf16.mxu0 0
  %410 = vmatpush1.bf16.msra.mxu0 0
  %411 = vmatprep.subr.bf16.mxu0 0
  %412 = vmatpush1.bf16.msra.mxu0 0
  %413 = vmatprep.subr.bf16.mxu0 0
  %414 = vmatpush1.bf16.msra.mxu0 0
  %415 = vmatprep.subr.bf16.mxu0 0
  %416 = vmatpush1.bf16.msra.mxu0 0
  %417 = vmatprep.subr.bf16.mxu0 0
  %418 = vmatpush1.bf16.msra.mxu0 0
  %419 = vmatprep.subr.bf16.mxu0 0
  %420 = vmatpush1.bf16.msra.mxu0 0
  %421 = vmatprep.subr.bf16.mxu0 0
  %422 = vmatpush1.bf16.msra.mxu0 0
  %423 = vmatprep.mubr.bf16.mxu0 0
  %424 = vmatmul.mubr.bf16.gmra.mrb[0].mxu0 %v319
  %v425 = vpop.f32.mrb[0].mxu0
  %v426 = vadd.f32 0.0, %v425
  %v427 = vpop.f32.mrb[0].mxu0
  %v428 = vpop.f32.mrb[0].mxu0
  %v429 = vadd.f32 0.0, %v428
  %v430 = vpop.f32.mrb[0].mxu0
  %431 = vmatprep.mubr.bf16.mxu0 0
  %432 = vmatmul.mubr.bf16.gmra.mrb[0].mxu0 %v320
  %v433 = vpop.f32.mrb[0].mxu0
  %v434 = vadd.f32 0.0, %v433
  %v435 = vpop.f32.mrb[0].mxu0
  %v436 = vpop.f32.mrb[0].mxu0
  %v437 = vadd.f32 0.0, %v436
  %v438 = vpop.f32.mrb[0].mxu0
  %439 = vmatprep.mubr.bf16.mxu0 0
  %440 = vmatmul.mubr.bf16.gmra.mrb[0].mxu0 %v321
  %v441 = vpop.f32.mrb[0].mxu0
  %v442 = vadd.f32 0.0, %v441
  %v443 = vpop.f32.mrb[0].mxu0
  %v444 = vpop.f32.mrb[0].mxu0
  %v445 = vadd.f32 0.0, %v444
  %v446 = vpop.f32.mrb[0].mxu0
  %447 = vmatprep.mubr.bf16.mxu0 0
  %448 = vmatmul.mubr.bf16.gmra.mrb[0].mxu0 %v322
  %v449 = vpop.f32.mrb[0].mxu0
  %v450 = vadd.f32 0.0, %v449
  %v451 = vpop.f32.mrb[0].mxu0
  %v452 = vpop.f32.mrb[0].mxu0
  %v453 = vadd.f32 0.0, %v452
  %v454 = vpop.f32.mrb[0].mxu0
  %455 = vmatprep.mubr.bf16.mxu0 0
  %456 = vmatmul.mubr.bf16.gmra.mrb[0].mxu0 %v323
  %v457 = vpop.f32.mrb[0].mxu0
  %v458 = vadd.f32 0.0, %v457
  %v459 = vpop.f32.mrb[0].mxu0
  %v460 = vpop.f32.mrb[0].mxu0
  %v461 = vadd.f32 0.0, %v460
  %v462 = vpop.f32.mrb[0].mxu0
  %463 = vmatprep.mubr.bf16.mxu0 0
  %464 = vmatmul.mubr.bf16.gmra.mrb[0].mxu0 %v324
  %v465 = vpop.f32.mrb[0].mxu0
  %v466 = vadd.f32 0.0, %v465
  %v467 = vpop.f32.mrb[0].mxu0
  %v468 = vpop.f32.mrb[0].mxu0
  %v469 = vadd.f32 0.0, %v468
  %v470 = vpop.f32.mrb[0].mxu0
  %471 = vmatprep.mubr.bf16.mxu0 0
  %472 = vmatmul.mubr.bf16.gmra.mrb[0].mxu0 %v325
  %v473 = vpop.f32.mrb[0].mxu0
  %v474 = vadd.f32 0.0, %v473
  %v475 = vpop.f32.mrb[0].mxu0
  %v476 = vpop.f32.mrb[0].mxu0
  %v477 = vadd.f32 0.0, %v476
  %v478 = vpop.f32.mrb[0].mxu0
  %479 = vmatprep.mubr.bf16.mxu0 0
  %480 = vmatmul.mubr.bf16.gmra.mrb[0].mxu0 %v326
  %v481 = vpop.f32.mrb[0].mxu0
  %v482 = vadd.f32 0.0, %v481
  %v483 = vpop.f32.mrb[0].mxu0
  %v484 = vpop.f32.mrb[0].mxu0
  %v485 = vadd.f32 0.0, %v484
  %v486 = vpop.f32.mrb[0].mxu0
  %487 = vdwg.mxu0
  %v488 = vpack.c.bf16 %v429, %v426
  %v489 = vpack.c.bf16 %v437, %v434
  %v490 = vpack.c.bf16 %v445, %v442
  %v491 = vpack.c.bf16 %v453, %v450
  %v492 = vpack.c.bf16 %v461, %v458
  %v493 = vpack.c.bf16 %v469, %v466
  %v494 = vpack.c.bf16 %v477, %v474
  %v495 = vpack.c.bf16 %v485, %v482
  %s496 = smul.u32 4, 16
  %s497 = smul.u32 %s496, 1
  %s498 = sshll.u32 %s497, 4
  %499 = dma.done [#allocation3], %s498
  %v500 = vld [vmem:[#allocation2] sm:$0xff]
  %v501 = vld [vmem:[#allocation2 + $0x8] sm:$0xff]
  %v502 = vld [vmem:[#allocation2 + $0x10] sm:$0xff]
  %v503 = vld [vmem:[#allocation2 + $0x18] sm:$0xff]
  %v504 = vld [vmem:[#allocation2 + $0x20] sm:$0xff]
  %v505 = vld [vmem:[#allocation2 + $0x28] sm:$0xff]
  %v506 = vld [vmem:[#allocation2 + $0x30] sm:$0xff]
  %v507 = vld [vmem:[#allocation2 + $0x38] sm:$0xff]
  %v508 = vld [vmem:[%s6] sm:$0x1]
  %v510 = vlaneseq
  %v511 = vshrl.u32 %v510, 7
  %v512 = vsub.s32 0, %v511
  %v513 = vrot.slane %v508, %v512
  %515 = vmatprep.subr.bf16.mxu0 0
  %516 = vmatpush1.bf16.msra.mxu0 %v488
  %517 = vmatprep.subr.bf16.mxu0 0
  %518 = vmatpush1.bf16.msra.mxu0 %v489
  %519 = vmatprep.subr.bf16.mxu0 0
  %520 = vmatpush1.bf16.msra.mxu0 %v490
  %521 = vmatprep.subr.bf16.mxu0 0
  %522 = vmatpush1.bf16.msra.mxu0 %v491
  %523 = vmatprep.subr.bf16.mxu0 0
  %524 = vmatpush1.bf16.msra.mxu0 %v492
  %525 = vmatprep.subr.bf16.mxu0 0
  %526 = vmatpush1.bf16.msra.mxu0 %v493
  %527 = vmatprep.subr.bf16.mxu0 0
  %528 = vmatpush1.bf16.msra.mxu0 %v494
  %529 = vmatprep.subr.bf16.mxu0 0
  %530 = vmatpush1.bf16.msra.mxu0 %v495
  %531 = vmatprep.subr.bf16.mxu0 0
  %532 = vmatpush1.bf16.msra.mxu0 0
  %533 = vmatprep.subr.bf16.mxu0 0
  %534 = vmatpush1.bf16.msra.mxu0 0
  %535 = vmatprep.subr.bf16.mxu0 0
  %536 = vmatpush1.bf16.msra.mxu0 0
  %537 = vmatprep.subr.bf16.mxu0 0
  %538 = vmatpush1.bf16.msra.mxu0 0
  %539 = vmatprep.subr.bf16.mxu0 0
  %540 = vmatpush1.bf16.msra.mxu0 0
  %541 = vmatprep.subr.bf16.mxu0 0
  %542 = vmatpush1.bf16.msra.mxu0 0
  %543 = vmatprep.subr.bf16.mxu0 0
  %544 = vmatpush1.bf16.msra.mxu0 0
  %545 = vmatprep.subr.bf16.mxu0 0
  %546 = vmatpush1.bf16.msra.mxu0 0
  %547 = vmatprep.mubr.bf16.mxu0 0
  %548 = vmatmul.mubr.bf16.gmra.mrb[0].mxu0 %v500
  %v549 = vpop.f32.mrb[0].mxu0
  %v550 = vadd.f32 %v513, %v549
  %v551 = vpop.f32.mrb[0].mxu0
  %v552 = vpop.f32.mrb[0].mxu0
  %v553 = vadd.f32 %v513, %v552
  %v554 = vpop.f32.mrb[0].mxu0
  %555 = vmatprep.mubr.bf16.mxu0 0
  %556 = vmatmul.mubr.bf16.gmra.mrb[0].mxu0 %v501
  %v557 = vpop.f32.mrb[0].mxu0
  %v558 = vadd.f32 %v513, %v557
  %v559 = vpop.f32.mrb[0].mxu0
  %v560 = vpop.f32.mrb[0].mxu0
  %v561 = vadd.f32 %v513, %v560
  %v562 = vpop.f32.mrb[0].mxu0
  %563 = vmatprep.mubr.bf16.mxu0 0
  %564 = vmatmul.mubr.bf16.gmra.mrb[0].mxu0 %v502
  %v565 = vpop.f32.mrb[0].mxu0
  %v566 = vadd.f32 %v513, %v565
  %v567 = vpop.f32.mrb[0].mxu0
  %v568 = vpop.f32.mrb[0].mxu0
  %v569 = vadd.f32 %v513, %v568
  %v570 = vpop.f32.mrb[0].mxu0
  %571 = vmatprep.mubr.bf16.mxu0 0
  %572 = vmatmul.mubr.bf16.gmra.mrb[0].mxu0 %v503
  %v573 = vpop.f32.mrb[0].mxu0
  %v574 = vadd.f32 %v513, %v573
  %v575 = vpop.f32.mrb[0].mxu0
  %v576 = vpop.f32.mrb[0].mxu0
  %v577 = vadd.f32 %v513, %v576
  %v578 = vpop.f32.mrb[0].mxu0
  %579 = vmatprep.mubr.bf16.mxu0 0
  %580 = vmatmul.mubr.bf16.gmra.mrb[0].mxu0 %v504
  %v581 = vpop.f32.mrb[0].mxu0
  %v582 = vadd.f32 %v513, %v581
  %v583 = vpop.f32.mrb[0].mxu0
  %v584 = vpop.f32.mrb[0].mxu0
  %v585 = vadd.f32 %v513, %v584
  %v586 = vpop.f32.mrb[0].mxu0
  %587 = vmatprep.mubr.bf16.mxu0 0
  %588 = vmatmul.mubr.bf16.gmra.mrb[0].mxu0 %v505
  %v589 = vpop.f32.mrb[0].mxu0
  %v590 = vadd.f32 %v513, %v589
  %v591 = vpop.f32.mrb[0].mxu0
  %v592 = vpop.f32.mrb[0].mxu0
  %v593 = vadd.f32 %v513, %v592
  %v594 = vpop.f32.mrb[0].mxu0
  %595 = vmatprep.mubr.bf16.mxu0 0
  %596 = vmatmul.mubr.bf16.gmra.mrb[0].mxu0 %v506
  %v597 = vpop.f32.mrb[0].mxu0
  %v598 = vadd.f32 %v513, %v597
  %v599 = vpop.f32.mrb[0].mxu0
  %v600 = vpop.f32.mrb[0].mxu0
  %v601 = vadd.f32 %v513, %v600
  %v602 = vpop.f32.mrb[0].mxu0
  %603 = vmatprep.mubr.bf16.mxu0 0
  %604 = vmatmul.mubr.bf16.gmra.mrb[0].mxu0 %v507
  %v605 = vpop.f32.mrb[0].mxu0
  %v606 = vadd.f32 %v513, %v605
  %v607 = vpop.f32.mrb[0].mxu0
  %v608 = vpop.f32.mrb[0].mxu0
  %v609 = vadd.f32 %v513, %v608
  %v610 = vpop.f32.mrb[0].mxu0
  %611 = vdwg.mxu0
  %v612 = vmax.f32 %v550, 0.0
  %v613 = vmax.f32 %v553, 0.0
  %v614 = vmax.f32 %v558, 0.0
  %v615 = vmax.f32 %v561, 0.0
  %v616 = vmax.f32 %v566, 0.0
  %v617 = vmax.f32 %v569, 0.0
  %v618 = vmax.f32 %v574, 0.0
  %v619 = vmax.f32 %v577, 0.0
  %v620 = vmax.f32 %v582, 0.0
  %v621 = vmax.f32 %v585, 0.0
  %v622 = vmax.f32 %v590, 0.0
  %v623 = vmax.f32 %v593, 0.0
  %v624 = vmax.f32 %v598, 0.0
  %v625 = vmax.f32 %v601, 0.0
  %v626 = vmax.f32 %v606, 0.0
  %v627 = vmax.f32 %v609, 0.0
  %v628 = vpack.c.bf16 %v613, %v612
  %v629 = vpack.c.bf16 %v615, %v614
  %v630 = vpack.c.bf16 %v617, %v616
  %v631 = vpack.c.bf16 %v619, %v618
  %v632 = vpack.c.bf16 %v621, %v620
  %v633 = vpack.c.bf16 %v623, %v622
  %v634 = vpack.c.bf16 %v625, %v624
  %v635 = vpack.c.bf16 %v627, %v626
  %v636 = vld [vmem:[%s7] sm:$0xf]
  %v637 = vld [vmem:[%s7 + $0x4] sm:$0xf]
  %v638 = vld [vmem:[%s7 + $0x8] sm:$0xf]
  %v639 = vld [vmem:[%s7 + $0xc] sm:$0xf]
  %v640 = vld [vmem:[%s7 + $0x10] sm:$0xf]
  %v641 = vld [vmem:[%s7 + $0x14] sm:$0xf]
  %v642 = vld [vmem:[%s7 + $0x18] sm:$0xf]
  %v643 = vld [vmem:[%s7 + $0x1c] sm:$0xf]
  %v644 = vld [vmem:[%s7 + $0x20] sm:$0xf]
  %v645 = vld [vmem:[%s7 + $0x24] sm:$0xf]
  %v646 = vld [vmem:[%s7 + $0x28] sm:$0xf]
  %v647 = vld [vmem:[%s7 + $0x2c] sm:$0xf]
  %v648 = vld [vmem:[%s7 + $0x30] sm:$0xf]
  %v649 = vld [vmem:[%s7 + $0x34] sm:$0xf]
  %v650 = vld [vmem:[%s7 + $0x38] sm:$0xf]
  %v651 = vld [vmem:[%s7 + $0x3c] sm:$0xf]
  %v668 = vunpack.c.l.b16 %v636
  %v669 = vunpack.c.l.b16 %v637
  %v670 = vunpack.c.l.b16 %v638
  %v671 = vunpack.c.l.b16 %v639
  %v672 = vunpack.c.l.b16 %v640
  %v673 = vunpack.c.l.b16 %v641
  %v674 = vunpack.c.l.b16 %v642
  %v675 = vunpack.c.l.b16 %v643
  %v676 = vunpack.c.l.b16 %v644
  %v677 = vunpack.c.l.b16 %v645
  %v678 = vunpack.c.l.b16 %v646
  %v679 = vunpack.c.l.b16 %v647
  %v680 = vunpack.c.l.b16 %v648
  %v681 = vunpack.c.l.b16 %v649
  %v682 = vunpack.c.l.b16 %v650
  %v683 = vunpack.c.l.b16 %v651
  %v684 = vpack.c.b16 %v669, %v668
  %v685 = vpack.c.b16 %v671, %v670
  %v686 = vpack.c.b16 %v673, %v672
  %v687 = vpack.c.b16 %v675, %v674
  %v688 = vpack.c.b16 %v677, %v676
  %v689 = vpack.c.b16 %v679, %v678
  %v690 = vpack.c.b16 %v681, %v680
  %v691 = vpack.c.b16 %v683, %v682
  %700 = vmatprep.subr.bf16.mxu0 0
  %701 = vmatpush1.bf16.msra.mxu0 %v684
  %702 = vmatprep.subr.bf16.mxu0 0
  %703 = vmatpush1.bf16.msra.mxu0 %v685
  %704 = vmatprep.subr.bf16.mxu0 0
  %705 = vmatpush1.bf16.msra.mxu0 %v686
  %706 = vmatprep.subr.bf16.mxu0 0
  %707 = vmatpush1.bf16.msra.mxu0 %v687
  %708 = vmatprep.subr.bf16.mxu0 0
  %709 = vmatpush1.bf16.msra.mxu0 %v688
  %710 = vmatprep.subr.bf16.mxu0 0
  %711 = vmatpush1.bf16.msra.mxu0 %v689
  %712 = vmatprep.subr.bf16.mxu0 0
  %713 = vmatpush1.bf16.msra.mxu0 %v690
  %714 = vmatprep.subr.bf16.mxu0 0
  %715 = vmatpush1.bf16.msra.mxu0 %v691
  %716 = vmatprep.subr.bf16.mxu0 0
  %717 = vmatpush1.bf16.msra.mxu0 0
  %718 = vmatprep.subr.bf16.mxu0 0
  %719 = vmatpush1.bf16.msra.mxu0 0
  %720 = vmatprep.subr.bf16.mxu0 0
  %721 = vmatpush1.bf16.msra.mxu0 0
  %722 = vmatprep.subr.bf16.mxu0 0
  %723 = vmatpush1.bf16.msra.mxu0 0
  %724 = vmatprep.subr.bf16.mxu0 0
  %725 = vmatpush1.bf16.msra.mxu0 0
  %726 = vmatprep.subr.bf16.mxu0 0
  %727 = vmatpush1.bf16.msra.mxu0 0
  %728 = vmatprep.subr.bf16.mxu0 0
  %729 = vmatpush1.bf16.msra.mxu0 0
  %730 = vmatprep.subr.bf16.mxu0 0
  %731 = vmatpush1.bf16.msra.mxu0 0
  %732 = vmatprep.mubr.bf16.mxu0 0
  %733 = vmatmul.mubr.bf16.gmra.mrb[0].mxu0 %v628
  %v734 = vpop.f32.mrb[0].mxu0
  %v735 = vadd.f32 0.0, %v734
  %v736 = vpop.f32.mrb[0].mxu0
  %v737 = vpop.f32.mrb[0].mxu0
  %v738 = vadd.f32 0.0, %v737
  %v739 = vpop.f32.mrb[0].mxu0
  %740 = vmatprep.mubr.bf16.mxu0 0
  %741 = vmatmul.mubr.bf16.gmra.mrb[0].mxu0 %v629
  %v742 = vpop.f32.mrb[0].mxu0
  %v743 = vadd.f32 0.0, %v742
  %v744 = vpop.f32.mrb[0].mxu0
  %v745 = vpop.f32.mrb[0].mxu0
  %v746 = vadd.f32 0.0, %v745
  %v747 = vpop.f32.mrb[0].mxu0
  %748 = vmatprep.mubr.bf16.mxu0 0
  %749 = vmatmul.mubr.bf16.gmra.mrb[0].mxu0 %v630
  %v750 = vpop.f32.mrb[0].mxu0
  %v751 = vadd.f32 0.0, %v750
  %v752 = vpop.f32.mrb[0].mxu0
  %v753 = vpop.f32.mrb[0].mxu0
  %v754 = vadd.f32 0.0, %v753
  %v755 = vpop.f32.mrb[0].mxu0
  %756 = vmatprep.mubr.bf16.mxu0 0
  %757 = vmatmul.mubr.bf16.gmra.mrb[0].mxu0 %v631
  %v758 = vpop.f32.mrb[0].mxu0
  %v759 = vadd.f32 0.0, %v758
  %v760 = vpop.f32.mrb[0].mxu0
  %v761 = vpop.f32.mrb[0].mxu0
  %v762 = vadd.f32 0.0, %v761
  %v763 = vpop.f32.mrb[0].mxu0
  %764 = vmatprep.mubr.bf16.mxu0 0
  %765 = vmatmul.mubr.bf16.gmra.mrb[0].mxu0 %v632
  %v766 = vpop.f32.mrb[0].mxu0
  %v767 = vadd.f32 0.0, %v766
  %v768 = vpop.f32.mrb[0].mxu0
  %v769 = vpop.f32.mrb[0].mxu0
  %v770 = vadd.f32 0.0, %v769
  %v771 = vpop.f32.mrb[0].mxu0
  %772 = vmatprep.mubr.bf16.mxu0 0
  %773 = vmatmul.mubr.bf16.gmra.mrb[0].mxu0 %v633
  %v774 = vpop.f32.mrb[0].mxu0
  %v775 = vadd.f32 0.0, %v774
  %v776 = vpop.f32.mrb[0].mxu0
  %v777 = vpop.f32.mrb[0].mxu0
  %v778 = vadd.f32 0.0, %v777
  %v779 = vpop.f32.mrb[0].mxu0
  %780 = vmatprep.mubr.bf16.mxu0 0
  %781 = vmatmul.mubr.bf16.gmra.mrb[0].mxu0 %v634
  %v782 = vpop.f32.mrb[0].mxu0
  %v783 = vadd.f32 0.0, %v782
  %v784 = vpop.f32.mrb[0].mxu0
  %v785 = vpop.f32.mrb[0].mxu0
  %v786 = vadd.f32 0.0, %v785
  %v787 = vpop.f32.mrb[0].mxu0
  %788 = vmatprep.mubr.bf16.mxu0 0
  %789 = vmatmul.mubr.bf16.gmra.mrb[0].mxu0 %v635
  %v790 = vpop.f32.mrb[0].mxu0
  %v791 = vadd.f32 0.0, %v790
  %v792 = vpop.f32.mrb[0].mxu0
  %v793 = vpop.f32.mrb[0].mxu0
  %v794 = vadd.f32 0.0, %v793
  %v795 = vpop.f32.mrb[0].mxu0
  %796 = vdwg.mxu0
  %v797 = vpack.c.bf16 %v738, %v735
  %v798 = vpack.c.bf16 %v746, %v743
  %v799 = vpack.c.bf16 %v754, %v751
  %v800 = vpack.c.bf16 %v762, %v759
  %v801 = vpack.c.bf16 %v770, %v767
  %v802 = vpack.c.bf16 %v778, %v775
  %v803 = vpack.c.bf16 %v786, %v783
  %v804 = vpack.c.bf16 %v794, %v791
  %v805 = vld [vmem:[%s8] sm:$0x1]
  %v807 = vlaneseq
  %v808 = vshrl.u32 %v807, 7
  %v809 = vsub.s32 0, %v808
  %v810 = vrot.slane %v805, %v809
  %812 = vmatprep.subr.bf16.mxu0 0
  %813 = vmatpush1.bf16.msra.mxu0 %v797
  %814 = vmatprep.subr.bf16.mxu0 0
  %815 = vmatpush1.bf16.msra.mxu0 %v798
  %816 = vmatprep.subr.bf16.mxu0 0
  %817 = vmatpush1.bf16.msra.mxu0 %v799
  %818 = vmatprep.subr.bf16.mxu0 0
  %819 = vmatpush1.bf16.msra.mxu0 %v800
  %820 = vmatprep.subr.bf16.mxu0 0
  %821 = vmatpush1.bf16.msra.mxu0 %v801
  %822 = vmatprep.subr.bf16.mxu0 0
  %823 = vmatpush1.bf16.msra.mxu0 %v802
  %824 = vmatprep.subr.bf16.mxu0 0
  %825 = vmatpush1.bf16.msra.mxu0 %v803
  %826 = vmatprep.subr.bf16.mxu0 0
  %827 = vmatpush1.bf16.msra.mxu0 %v804
  %828 = vmatprep.subr.bf16.mxu0 0
  %829 = vmatpush1.bf16.msra.mxu0 0
  %830 = vmatprep.subr.bf16.mxu0 0
  %831 = vmatpush1.bf16.msra.mxu0 0
  %832 = vmatprep.subr.bf16.mxu0 0
  %833 = vmatpush1.bf16.msra.mxu0 0
  %834 = vmatprep.subr.bf16.mxu0 0
  %835 = vmatpush1.bf16.msra.mxu0 0
  %836 = vmatprep.subr.bf16.mxu0 0
  %837 = vmatpush1.bf16.msra.mxu0 0
  %838 = vmatprep.subr.bf16.mxu0 0
  %839 = vmatpush1.bf16.msra.mxu0 0
  %840 = vmatprep.subr.bf16.mxu0 0
  %841 = vmatpush1.bf16.msra.mxu0 0
  %842 = vmatprep.subr.bf16.mxu0 0
  %843 = vmatpush1.bf16.msra.mxu0 0
  %844 = vmatprep.mubr.bf16.mxu0 0
  %845 = vmatmul.mubr.bf16.gmra.mrb[0].mxu0 %v500
  %v846 = vpop.f32.mrb[0].mxu0
  %v847 = vadd.f32 %v810, %v846
  %v848 = vpop.f32.mrb[0].mxu0
  %v849 = vpop.f32.mrb[0].mxu0
  %v850 = vadd.f32 %v810, %v849
  %v851 = vpop.f32.mrb[0].mxu0
  %852 = vmatprep.mubr.bf16.mxu0 0
  %853 = vmatmul.mubr.bf16.gmra.mrb[0].mxu0 %v501
  %v854 = vpop.f32.mrb[0].mxu0
  %v855 = vadd.f32 %v810, %v854
  %v856 = vpop.f32.mrb[0].mxu0
  %v857 = vpop.f32.mrb[0].mxu0
  %v858 = vadd.f32 %v810, %v857
  %v859 = vpop.f32.mrb[0].mxu0
  %860 = vmatprep.mubr.bf16.mxu0 0
  %861 = vmatmul.mubr.bf16.gmra.mrb[0].mxu0 %v502
  %v862 = vpop.f32.mrb[0].mxu0
  %v863 = vadd.f32 %v810, %v862
  %v864 = vpop.f32.mrb[0].mxu0
  %v865 = vpop.f32.mrb[0].mxu0
  %v866 = vadd.f32 %v810, %v865
  %v867 = vpop.f32.mrb[0].mxu0
  %868 = vmatprep.mubr.bf16.mxu0 0
  %869 = vmatmul.mubr.bf16.gmra.mrb[0].mxu0 %v503
  %v870 = vpop.f32.mrb[0].mxu0
  %v871 = vadd.f32 %v810, %v870
  %v872 = vpop.f32.mrb[0].mxu0
  %v873 = vpop.f32.mrb[0].mxu0
  %v874 = vadd.f32 %v810, %v873
  %v875 = vpop.f32.mrb[0].mxu0
  %876 = vmatprep.mubr.bf16.mxu0 0
  %877 = vmatmul.mubr.bf16.gmra.mrb[0].mxu0 %v504
  %v878 = vpop.f32.mrb[0].mxu0
  %v879 = vadd.f32 %v810, %v878
  %v880 = vpop.f32.mrb[0].mxu0
  %v881 = vpop.f32.mrb[0].mxu0
  %v882 = vadd.f32 %v810, %v881
  %v883 = vpop.f32.mrb[0].mxu0
  %884 = vmatprep.mubr.bf16.mxu0 0
  %885 = vmatmul.mubr.bf16.gmra.mrb[0].mxu0 %v505
  %v886 = vpop.f32.mrb[0].mxu0
  %v887 = vadd.f32 %v810, %v886
  %v888 = vpop.f32.mrb[0].mxu0
  %v889 = vpop.f32.mrb[0].mxu0
  %v890 = vadd.f32 %v810, %v889
  %v891 = vpop.f32.mrb[0].mxu0
  %892 = vmatprep.mubr.bf16.mxu0 0
  %893 = vmatmul.mubr.bf16.gmra.mrb[0].mxu0 %v506
  %v894 = vpop.f32.mrb[0].mxu0
  %v895 = vadd.f32 %v810, %v894
  %v896 = vpop.f32.mrb[0].mxu0
  %v897 = vpop.f32.mrb[0].mxu0
  %v898 = vadd.f32 %v810, %v897
  %v899 = vpop.f32.mrb[0].mxu0
  %900 = vmatprep.mubr.bf16.mxu0 0
  %901 = vmatmul.mubr.bf16.gmra.mrb[0].mxu0 %v507
  %v902 = vpop.f32.mrb[0].mxu0
  %v903 = vadd.f32 %v810, %v902
  %v904 = vpop.f32.mrb[0].mxu0
  %v905 = vpop.f32.mrb[0].mxu0
  %v906 = vadd.f32 %v810, %v905
  %v907 = vpop.f32.mrb[0].mxu0
  %908 = vdwg.mxu0
  %909 = vst [vmem:[%s11] sm:$0xff] %v847
  %910 = vst [vmem:[%s11 + $0x8] sm:$0xff] %v850
  %911 = vst [vmem:[%s11 + $0x10] sm:$0xff] %v855
  %912 = vst [vmem:[%s11 + $0x18] sm:$0xff] %v858
  %913 = vst [vmem:[%s11 + $0x20] sm:$0xff] %v863
  %914 = vst [vmem:[%s11 + $0x28] sm:$0xff] %v866
  %915 = vst [vmem:[%s11 + $0x30] sm:$0xff] %v871
  %916 = vst [vmem:[%s11 + $0x38] sm:$0xff] %v874
  %917 = vst [vmem:[%s11 + $0x40] sm:$0xff] %v879
  %918 = vst [vmem:[%s11 + $0x48] sm:$0xff] %v882
  %919 = vst [vmem:[%s11 + $0x50] sm:$0xff] %v887
  %920 = vst [vmem:[%s11 + $0x58] sm:$0xff] %v890
  %921 = vst [vmem:[%s11 + $0x60] sm:$0xff] %v895
  %922 = vst [vmem:[%s11 + $0x68] sm:$0xff] %v898
  %923 = vst [vmem:[%s11 + $0x70] sm:$0xff] %v903
  %924 = vst [vmem:[%s11 + $0x78] sm:$0xff] %v906
  %v925 = vmax.f32 %v847, 0.0
  %v926 = vmax.f32 %v850, 0.0
  %v927 = vmax.f32 %v855, 0.0
  %v928 = vmax.f32 %v858, 0.0
  %v929 = vmax.f32 %v863, 0.0
  %v930 = vmax.f32 %v866, 0.0
  %v931 = vmax.f32 %v871, 0.0
  %v932 = vmax.f32 %v874, 0.0
  %v933 = vmax.f32 %v879, 0.0
  %v934 = vmax.f32 %v882, 0.0
  %v935 = vmax.f32 %v887, 0.0
  %v936 = vmax.f32 %v890, 0.0
  %v937 = vmax.f32 %v895, 0.0
  %v938 = vmax.f32 %v898, 0.0
  %v939 = vmax.f32 %v903, 0.0
  %v940 = vmax.f32 %v906, 0.0
  %v941 = vpack.c.bf16 %v926, %v925
  %v942 = vpack.c.bf16 %v928, %v927
  %v943 = vpack.c.bf16 %v930, %v929
  %v944 = vpack.c.bf16 %v932, %v931
  %v945 = vpack.c.bf16 %v934, %v933
  %v946 = vpack.c.bf16 %v936, %v935
  %v947 = vpack.c.bf16 %v938, %v937
  %v948 = vpack.c.bf16 %v940, %v939
  %v949 = vld [vmem:[%s9] sm:$0xf]
  %v950 = vld [vmem:[%s9 + $0x4] sm:$0xf]
  %v951 = vld [vmem:[%s9 + $0x8] sm:$0xf]
  %v952 = vld [vmem:[%s9 + $0xc] sm:$0xf]
  %v953 = vld [vmem:[%s9 + $0x10] sm:$0xf]
  %v954 = vld [vmem:[%s9 + $0x14] sm:$0xf]
  %v955 = vld [vmem:[%s9 + $0x18] sm:$0xf]
  %v956 = vld [vmem:[%s9 + $0x1c] sm:$0xf]
  %v957 = vld [vmem:[%s9 + $0x20] sm:$0xf]
  %v958 = vld [vmem:[%s9 + $0x24] sm:$0xf]
  %v959 = vld [vmem:[%s9 + $0x28] sm:$0xf]
  %v960 = vld [vmem:[%s9 + $0x2c] sm:$0xf]
  %v961 = vld [vmem:[%s9 + $0x30] sm:$0xf]
  %v962 = vld [vmem:[%s9 + $0x34] sm:$0xf]
  %v963 = vld [vmem:[%s9 + $0x38] sm:$0xf]
  %v964 = vld [vmem:[%s9 + $0x3c] sm:$0xf]
  %v981 = vunpack.c.l.b16 %v949
  %v982 = vunpack.c.l.b16 %v950
  %v983 = vunpack.c.l.b16 %v951
  %v984 = vunpack.c.l.b16 %v952
  %v985 = vunpack.c.l.b16 %v953
  %v986 = vunpack.c.l.b16 %v954
  %v987 = vunpack.c.l.b16 %v955
  %v988 = vunpack.c.l.b16 %v956
  %v989 = vunpack.c.l.b16 %v957
  %v990 = vunpack.c.l.b16 %v958
  %v991 = vunpack.c.l.b16 %v959
  %v992 = vunpack.c.l.b16 %v960
  %v993 = vunpack.c.l.b16 %v961
  %v994 = vunpack.c.l.b16 %v962
  %v995 = vunpack.c.l.b16 %v963
  %v996 = vunpack.c.l.b16 %v964
  %v997 = vpack.c.b16 %v982, %v981
  %v998 = vpack.c.b16 %v984, %v983
  %v999 = vpack.c.b16 %v986, %v985
  %v1000 = vpack.c.b16 %v988, %v987
  %v1001 = vpack.c.b16 %v990, %v989
  %v1002 = vpack.c.b16 %v992, %v991
  %v1003 = vpack.c.b16 %v994, %v993
  %v1004 = vpack.c.b16 %v996, %v995
  %1013 = vmatprep.subr.bf16.mxu0 0
  %1014 = vmatpush1.bf16.msra.mxu0 %v997
  %1015 = vmatprep.subr.bf16.mxu0 0
  %1016 = vmatpush1.bf16.msra.mxu0 %v998
  %1017 = vmatprep.subr.bf16.mxu0 0
  %1018 = vmatpush1.bf16.msra.mxu0 %v999
  %1019 = vmatprep.subr.bf16.mxu0 0
  %1020 = vmatpush1.bf16.msra.mxu0 %v1000
  %1021 = vmatprep.subr.bf16.mxu0 0
  %1022 = vmatpush1.bf16.msra.mxu0 %v1001
  %1023 = vmatprep.subr.bf16.mxu0 0
  %1024 = vmatpush1.bf16.msra.mxu0 %v1002
  %1025 = vmatprep.subr.bf16.mxu0 0
  %1026 = vmatpush1.bf16.msra.mxu0 %v1003
  %1027 = vmatprep.subr.bf16.mxu0 0
  %1028 = vmatpush1.bf16.msra.mxu0 %v1004
  %1029 = vmatprep.subr.bf16.mxu0 0
  %1030 = vmatpush1.bf16.msra.mxu0 0
  %1031 = vmatprep.subr.bf16.mxu0 0
  %1032 = vmatpush1.bf16.msra.mxu0 0
  %1033 = vmatprep.subr.bf16.mxu0 0
  %1034 = vmatpush1.bf16.msra.mxu0 0
  %1035 = vmatprep.subr.bf16.mxu0 0
  %1036 = vmatpush1.bf16.msra.mxu0 0
  %1037 = vmatprep.subr.bf16.mxu0 0
  %1038 = vmatpush1.bf16.msra.mxu0 0
  %1039 = vmatprep.subr.bf16.mxu0 0
  %1040 = vmatpush1.bf16.msra.mxu0 0
  %1041 = vmatprep.subr.bf16.mxu0 0
  %1042 = vmatpush1.bf16.msra.mxu0 0
  %1043 = vmatprep.subr.bf16.mxu0 0
  %1044 = vmatpush1.bf16.msra.mxu0 0
  %1045 = vmatprep.mubr.bf16.mxu0 0
  %1046 = vmatmul.mubr.bf16.gmra.mrb[0].mxu0 %v941
  %v1047 = vpop.f32.mrb[0].mxu0
  %v1048 = vadd.f32 0.0, %v1047
  %v1049 = vpop.f32.mrb[0].mxu0
  %v1050 = vpop.f32.mrb[0].mxu0
  %v1051 = vadd.f32 0.0, %v1050
  %v1052 = vpop.f32.mrb[0].mxu0
  %1053 = vmatprep.mubr.bf16.mxu0 0
  %1054 = vmatmul.mubr.bf16.gmra.mrb[0].mxu0 %v942
  %v1055 = vpop.f32.mrb[0].mxu0
  %v1056 = vadd.f32 0.0, %v1055
  %v1057 = vpop.f32.mrb[0].mxu0
  %v1058 = vpop.f32.mrb[0].mxu0
  %v1059 = vadd.f32 0.0, %v1058
  %v1060 = vpop.f32.mrb[0].mxu0
  %1061 = vmatprep.mubr.bf16.mxu0 0
  %1062 = vmatmul.mubr.bf16.gmra.mrb[0].mxu0 %v943
  %v1063 = vpop.f32.mrb[0].mxu0
  %v1064 = vadd.f32 0.0, %v1063
  %v1065 = vpop.f32.mrb[0].mxu0
  %v1066 = vpop.f32.mrb[0].mxu0
  %v1067 = vadd.f32 0.0, %v1066
  %v1068 = vpop.f32.mrb[0].mxu0
  %1069 = vmatprep.mubr.bf16.mxu0 0
  %1070 = vmatmul.mubr.bf16.gmra.mrb[0].mxu0 %v944
  %v1071 = vpop.f32.mrb[0].mxu0
  %v1072 = vadd.f32 0.0, %v1071
  %v1073 = vpop.f32.mrb[0].mxu0
  %v1074 = vpop.f32.mrb[0].mxu0
  %v1075 = vadd.f32 0.0, %v1074
  %v1076 = vpop.f32.mrb[0].mxu0
  %1077 = vmatprep.mubr.bf16.mxu0 0
  %1078 = vmatmul.mubr.bf16.gmra.mrb[0].mxu0 %v945
  %v1079 = vpop.f32.mrb[0].mxu0
  %v1080 = vadd.f32 0.0, %v1079
  %v1081 = vpop.f32.mrb[0].mxu0
  %v1082 = vpop.f32.mrb[0].mxu0
  %v1083 = vadd.f32 0.0, %v1082
  %v1084 = vpop.f32.mrb[0].mxu0
  %1085 = vmatprep.mubr.bf16.mxu0 0
  %1086 = vmatmul.mubr.bf16.gmra.mrb[0].mxu0 %v946
  %v1087 = vpop.f32.mrb[0].mxu0
  %v1088 = vadd.f32 0.0, %v1087
  %v1089 = vpop.f32.mrb[0].mxu0
  %v1090 = vpop.f32.mrb[0].mxu0
  %v1091 = vadd.f32 0.0, %v1090
  %v1092 = vpop.f32.mrb[0].mxu0
  %1093 = vmatprep.mubr.bf16.mxu0 0
  %1094 = vmatmul.mubr.bf16.gmra.mrb[0].mxu0 %v947
  %v1095 = vpop.f32.mrb[0].mxu0
  %v1096 = vadd.f32 0.0, %v1095
  %v1097 = vpop.f32.mrb[0].mxu0
  %v1098 = vpop.f32.mrb[0].mxu0
  %v1099 = vadd.f32 0.0, %v1098
  %v1100 = vpop.f32.mrb[0].mxu0
  %1101 = vmatprep.mubr.bf16.mxu0 0
  %1102 = vmatmul.mubr.bf16.gmra.mrb[0].mxu0 %v948
  %v1103 = vpop.f32.mrb[0].mxu0
  %v1104 = vadd.f32 0.0, %v1103
  %v1105 = vpop.f32.mrb[0].mxu0
  %v1106 = vpop.f32.mrb[0].mxu0
  %v1107 = vadd.f32 0.0, %v1106
  %v1108 = vpop.f32.mrb[0].mxu0
  %1109 = vdwg.mxu0
  %v1110 = vpack.c.bf16 %v1051, %v1048
  %v1111 = vpack.c.bf16 %v1059, %v1056
  %v1112 = vpack.c.bf16 %v1067, %v1064
  %v1113 = vpack.c.bf16 %v1075, %v1072
  %v1114 = vpack.c.bf16 %v1083, %v1080
  %v1115 = vpack.c.bf16 %v1091, %v1088
  %v1116 = vpack.c.bf16 %v1099, %v1096
  %v1117 = vpack.c.bf16 %v1107, %v1104
  %v1118 = vld [vmem:[%s10] sm:$0x1]
  %v1120 = vlaneseq
  %v1121 = vshrl.u32 %v1120, 7
  %v1122 = vsub.s32 0, %v1121
  %v1123 = vrot.slane %v1118, %v1122
  %1125 = vmatprep.subr.bf16.mxu0 0
  %1126 = vmatpush1.bf16.msra.mxu0 %v1110
  %1127 = vmatprep.subr.bf16.mxu0 0
  %1128 = vmatpush1.bf16.msra.mxu0 %v1111
  %1129 = vmatprep.subr.bf16.mxu0 0
  %1130 = vmatpush1.bf16.msra.mxu0 %v1112
  %1131 = vmatprep.subr.bf16.mxu0 0
  %1132 = vmatpush1.bf16.msra.mxu0 %v1113
  %1133 = vmatprep.subr.bf16.mxu0 0
  %1134 = vmatpush1.bf16.msra.mxu0 %v1114
  %1135 = vmatprep.subr.bf16.mxu0 0
  %1136 = vmatpush1.bf16.msra.mxu0 %v1115
  %1137 = vmatprep.subr.bf16.mxu0 0
  %1138 = vmatpush1.bf16.msra.mxu0 %v1116
  %1139 = vmatprep.subr.bf16.mxu0 0
  %1140 = vmatpush1.bf16.msra.mxu0 %v1117
  %1141 = vmatprep.subr.bf16.mxu0 0
  %1142 = vmatpush1.bf16.msra.mxu0 0
  %1143 = vmatprep.subr.bf16.mxu0 0
  %1144 = vmatpush1.bf16.msra.mxu0 0
  %1145 = vmatprep.subr.bf16.mxu0 0
  %1146 = vmatpush1.bf16.msra.mxu0 0
  %1147 = vmatprep.subr.bf16.mxu0 0
  %1148 = vmatpush1.bf16.msra.mxu0 0
  %1149 = vmatprep.subr.bf16.mxu0 0
  %1150 = vmatpush1.bf16.msra.mxu0 0
  %1151 = vmatprep.subr.bf16.mxu0 0
  %1152 = vmatpush1.bf16.msra.mxu0 0
  %1153 = vmatprep.subr.bf16.mxu0 0
  %1154 = vmatpush1.bf16.msra.mxu0 0
  %1155 = vmatprep.subr.bf16.mxu0 0
  %1156 = vmatpush1.bf16.msra.mxu0 0
  %1157 = vmatprep.mubr.bf16.mxu0 0
  %1158 = vmatmul.mubr.bf16.gmra.mrb[0].mxu0 %v500
  %v1159 = vpop.f32.mrb[0].mxu0
  %v1160 = vadd.f32 %v1123, %v1159
  %v1161 = vpop.f32.mrb[0].mxu0
  %v1162 = vpop.f32.mrb[0].mxu0
  %v1163 = vadd.f32 %v1123, %v1162
  %v1164 = vpop.f32.mrb[0].mxu0
  %1165 = vmatprep.mubr.bf16.mxu0 0
  %1166 = vmatmul.mubr.bf16.gmra.mrb[0].mxu0 %v501
  %v1167 = vpop.f32.mrb[0].mxu0
  %v1168 = vadd.f32 %v1123, %v1167
  %v1169 = vpop.f32.mrb[0].mxu0
  %v1170 = vpop.f32.mrb[0].mxu0
  %v1171 = vadd.f32 %v1123, %v1170
  %v1172 = vpop.f32.mrb[0].mxu0
  %1173 = vmatprep.mubr.bf16.mxu0 0
  %1174 = vmatmul.mubr.bf16.gmra.mrb[0].mxu0 %v502
  %v1175 = vpop.f32.mrb[0].mxu0
  %v1176 = vadd.f32 %v1123, %v1175
  %v1177 = vpop.f32.mrb[0].mxu0
  %v1178 = vpop.f32.mrb[0].mxu0
  %v1179 = vadd.f32 %v1123, %v1178
  %v1180 = vpop.f32.mrb[0].mxu0
  %1181 = vmatprep.mubr.bf16.mxu0 0
  %1182 = vmatmul.mubr.bf16.gmra.mrb[0].mxu0 %v503
  %v1183 = vpop.f32.mrb[0].mxu0
  %v1184 = vadd.f32 %v1123, %v1183
  %v1185 = vpop.f32.mrb[0].mxu0
  %v1186 = vpop.f32.mrb[0].mxu0
  %v1187 = vadd.f32 %v1123, %v1186
  %v1188 = vpop.f32.mrb[0].mxu0
  %1189 = vmatprep.mubr.bf16.mxu0 0
  %1190 = vmatmul.mubr.bf16.gmra.mrb[0].mxu0 %v504
  %v1191 = vpop.f32.mrb[0].mxu0
  %v1192 = vadd.f32 %v1123, %v1191
  %v1193 = vpop.f32.mrb[0].mxu0
  %v1194 = vpop.f32.mrb[0].mxu0
  %v1195 = vadd.f32 %v1123, %v1194
  %v1196 = vpop.f32.mrb[0].mxu0
  %1197 = vmatprep.mubr.bf16.mxu0 0
  %1198 = vmatmul.mubr.bf16.gmra.mrb[0].mxu0 %v505
  %v1199 = vpop.f32.mrb[0].mxu0
  %v1200 = vadd.f32 %v1123, %v1199
  %v1201 = vpop.f32.mrb[0].mxu0
  %v1202 = vpop.f32.mrb[0].mxu0
  %v1203 = vadd.f32 %v1123, %v1202
  %v1204 = vpop.f32.mrb[0].mxu0
  %1205 = vmatprep.mubr.bf16.mxu0 0
  %1206 = vmatmul.mubr.bf16.gmra.mrb[0].mxu0 %v506
  %v1207 = vpop.f32.mrb[0].mxu0
  %v1208 = vadd.f32 %v1123, %v1207
  %v1209 = vpop.f32.mrb[0].mxu0
  %v1210 = vpop.f32.mrb[0].mxu0
  %v1211 = vadd.f32 %v1123, %v1210
  %v1212 = vpop.f32.mrb[0].mxu0
  %1213 = vmatprep.mubr.bf16.mxu0 0
  %1214 = vmatmul.mubr.bf16.gmra.mrb[0].mxu0 %v507
  %v1215 = vpop.f32.mrb[0].mxu0
  %v1216 = vadd.f32 %v1123, %v1215
  %v1217 = vpop.f32.mrb[0].mxu0
  %v1218 = vpop.f32.mrb[0].mxu0
  %v1219 = vadd.f32 %v1123, %v1218
  %v1220 = vpop.f32.mrb[0].mxu0
  %1221 = vdwg.mxu0
  %1222 = vst [vmem:[%s12] sm:$0xff] %v1160
  %1223 = vst [vmem:[%s12 + $0x8] sm:$0xff] %v1163
  %1224 = vst [vmem:[%s12 + $0x10] sm:$0xff] %v1168
  %1225 = vst [vmem:[%s12 + $0x18] sm:$0xff] %v1171
  %1226 = vst [vmem:[%s12 + $0x20] sm:$0xff] %v1176
  %1227 = vst [vmem:[%s12 + $0x28] sm:$0xff] %v1179
  %1228 = vst [vmem:[%s12 + $0x30] sm:$0xff] %v1184
  %1229 = vst [vmem:[%s12 + $0x38] sm:$0xff] %v1187
  %1230 = vst [vmem:[%s12 + $0x40] sm:$0xff] %v1192
  %1231 = vst [vmem:[%s12 + $0x48] sm:$0xff] %v1195
  %1232 = vst [vmem:[%s12 + $0x50] sm:$0xff] %v1200
  %1233 = vst [vmem:[%s12 + $0x58] sm:$0xff] %v1203
  %1234 = vst [vmem:[%s12 + $0x60] sm:$0xff] %v1208
  %1235 = vst [vmem:[%s12 + $0x68] sm:$0xff] %v1211
  %1236 = vst [vmem:[%s12 + $0x70] sm:$0xff] %v1216
  %1237 = vst [vmem:[%s12 + $0x78] sm:$0xff] %v1219
  // Predicated region
  $region76: #{gcn_forward.1} parent=0 // pred_check
    _
  $region77: #{gcn_forward.1} parent=0 // pred_check_branch
    %1239 = sbr.rel (0) target = $region79
  $region78: #{gcn_forward.1} parent=0 // pred_region
    _
  $region79: #{gcn_forward.1} parent=0 // pred_fallthru
    _
  // Predicated region
  $region80: #{gcn_forward.1} parent=0 // pred_check
    _
  $region81: #{gcn_forward.1} parent=0 // pred_check_branch
    %1241 = sbr.rel (0) target = $region83
  $region82: #{gcn_forward.1} parent=0 // pred_region
    _
  $region83: #{gcn_forward.1} parent=0 // pred_fallthru
    _
  // Predicated region
  $region84: #{gcn_forward.1} parent=0 // pred_check
    _
  $region85: #{gcn_forward.1} parent=0 // pred_check_branch
    %1243 = sbr.rel (0) target = $region87
  $region86: #{gcn_forward.1} parent=0 // pred_region
    _
  $region87: #{gcn_forward.1} parent=0 // pred_fallthru
    _
  // Predicated region
  $region88: #{gcn_forward.1} parent=0 // pred_check
    _
  $region89: #{gcn_forward.1} parent=0 // pred_check_branch
    %1245 = sbr.rel (0) target = $region91
  $region90: #{gcn_forward.1} parent=0 // pred_region
    _
  $region91: #{gcn_forward.1} parent=0 // pred_fallthru
    _
  %1246 = vsyncmov [#allocation3]
  %s1247 = vpop.sfrf %1246
  %p1248 = scmp.eq.s32.totalorder %s1247, 0
  %p1249 = pneg %p1248
  %1251 = shalt.err (%p1249)

</llo_original>
